<compile_context>
chip_gen: v7x
topology: tpu7x:2x2x1
jax: 0.10.0
libtpu: 0.0.40
codegen_flags: <defaults>
</compile_context>

<pallas_src>
import functools
import math

import jax
import jax.numpy as jnp
from jax.experimental import pallas as pl
from jax.experimental.pallas import tpu as pltpu

NHEAD = 4
EPS = 1e-5


def _layernorm(x, g, b):
    # PyTorch LayerNorm: biased variance, eps inside rsqrt.
    mu = jnp.mean(x, axis=-1, keepdims=True)
    var = jnp.mean((x - mu) ** 2, axis=-1, keepdims=True)
    return (x - mu) * jax.lax.rsqrt(var + EPS) * g + b


def encoder_stack_kernel(x_ref,
                         w_qkv_ref, b_qkv_ref, w_out_ref, b_out_ref,
                         g1_ref, be1_ref, w1_ref, b1_ref,
                         w2_ref, b2_ref, g2_ref, be2_ref,
                         *rest, nhead, num_layers, has_final_norm):
    """One grid step = one encoder layer applied to one batch chunk."""
    if has_final_norm:
        gf_ref, bf_ref, o_ref, h_ref = rest
    else:
        o_ref, h_ref = rest

    layer = pl.program_id(1)

    # Load the chunk's activations into the persistent carry on the first layer.
    @pl.when(layer == 0)
    def _():
        h_ref[...] = x_ref[...].astype(jnp.float32)

    BC, S, D = h_ref.shape
    Dh = D // nhead
    T = BC * S

    # Per-layer parameters (leading layer-block dim of size 1).
    w_qkv = w_qkv_ref[0]            # (D, 3D)  bf16, Q columns pre-scaled by 1/sqrt(Dh)
    b_qkv = b_qkv_ref[0]            # (1, 3D)  f32
    w_out = w_out_ref[0]            # (D, D)   bf16
    b_out = b_out_ref[0]            # (1, D)   f32
    g1, be1 = g1_ref[0], be1_ref[0]
    w1, b1 = w1_ref[0], b1_ref[0]   # (D, FF) bf16 / (1, FF) f32
    w2, b2 = w2_ref[0], b2_ref[0]   # (FF, D) bf16 / (1, D)  f32
    g2, be2 = g2_ref[0], be2_ref[0]

    mm_dtype = w_qkv.dtype          # matmul operand dtype (bf16)

    # Token-parallel activation slab: batch folded into the row dimension.
    h = h_ref[...].reshape(T, D)    # (T, D) f32

    # ---- multi-head self-attention ----
    # One wide QKV matmul over all tokens of the chunk (bf16 in, f32 acc).
    qkv = jnp.dot(h.astype(mm_dtype), w_qkv,
                  preferred_element_type=jnp.float32) + b_qkv       # (T, 3D)

    head_outs = []
    for hd in range(nhead):                                         # static head loop
        lo = hd * Dh
        qh = qkv[:, lo:lo + Dh].reshape(BC, S, Dh)
        kh = qkv[:, D + lo:D + lo + Dh].reshape(BC, S, Dh)
        vh = qkv[:, 2 * D + lo:2 * D + lo + Dh].reshape(BC, S, Dh)

        s = jnp.einsum('bqd,bkd->bqk', qh.astype(mm_dtype), kh.astype(mm_dtype),
                       preferred_element_type=jnp.float32)          # (BC, S, S)
        m = jnp.max(s, axis=-1, keepdims=True)
        p = jnp.exp(s - m)
        denom = jnp.sum(p, axis=-1, keepdims=True)
        p = p * pl.reciprocal(denom, approx=False)                  # exact softmax
        ah = jnp.einsum('bqk,bkd->bqd', p.astype(mm_dtype), vh.astype(mm_dtype),
                        preferred_element_type=jnp.float32)         # (BC, S, Dh)
        head_outs.append(ah.reshape(T, Dh))

    # Assemble heads and run ONE full-K out-projection matmul (K = D, not Dh).
    a_all = jnp.concatenate(head_outs, axis=-1)                     # (T, D)
    attn = jnp.dot(a_all.astype(mm_dtype), w_out,
                   preferred_element_type=jnp.float32) + b_out      # (T, D)

    # residual + norm1 (post-norm, PyTorch default)
    h1 = _layernorm(h + attn, g1, be1)

    # ---- feed-forward (ReLU) ----
    f = jnp.maximum(jnp.dot(h1.astype(mm_dtype), w1,
                            preferred_element_type=jnp.float32) + b1, 0.0)
    f = jnp.dot(f.astype(mm_dtype), w2,
                preferred_element_type=jnp.float32) + b2

    # residual + norm2
    h_new = _layernorm(h1 + f, g2, be2)

    # Carry the activation for the next layer step.
    h_ref[...] = h_new.reshape(BC, S, D)

    # Emit the chunk's output only on the last layer step.
    @pl.when(layer == num_layers - 1)
    def _():
        out = h_new
        if has_final_norm:
            out = _layernorm(out, gf_ref[...], bf_ref[...])
        o_ref[...] = out.reshape(BC, S, D).astype(o_ref.dtype)


def _num_tensorcores_per_chip():
    """2 on v7x (2 TensorCores / chip), else 1 (v5e / v6e)."""
    try:
        kind = jax.devices()[0].device_kind.lower()
    except Exception:
        return 1
    return 2 if "v7" in kind else 1


def transformer_layer_forward(x, fused_params, norm_params=None, *, nhead=NHEAD):
    """Equivalent of TransformerLayer.forward as one layer-streaming pallas_call."""
    B, S, D = x.shape
    L = int(fused_params["w_qkv"].shape[0])
    FF = int(fused_params["w1"].shape[-1])
    H = nhead
    Dh = D // H

    # Generation-aware chunking: only split the batch when there are 2 TCs.
    n_tc = _num_tensorcores_per_chip()
    num_chunks = 2 if (n_tc >= 2 and B >= 2 and B % 2 == 0) else 1
    # TODO(synk): on v7x with B == 1, split along query rows (flash-style) so
    # the second TensorCore is not idle.
    BC = B // num_chunks

    names = ["w_qkv", "b_qkv", "w_out", "b_out", "g1", "be1",
             "w1", "b1", "w2", "b2", "g2", "be2"]
    weight_args = [fused_params[n] for n in names]
    has_final_norm = norm_params is not None

    def layer_spec(arr):
        # One layer's slice per grid step along the 'arbitrary' layer axis.
        shape = arr.shape                       # (L, ...)
        blk = (1,) + tuple(shape[1:])
        nd = len(shape)
        return pl.BlockSpec(blk, lambda c, l, nd=nd: (l,) + (0,) * (nd - 1))

    in_specs = [pl.BlockSpec((BC, S, D), lambda c, l: (c, 0, 0))]
    in_specs += [layer_spec(w) for w in weight_args]
    call_args = [x] + weight_args

    if has_final_norm:
        for p in norm_params:
            nd = len(p.shape)
            in_specs.append(pl.BlockSpec(p.shape, lambda c, l, nd=nd: (0,) * nd))
            call_args.append(p)

    kern = functools.partial(encoder_stack_kernel, nhead=nhead,
                             num_layers=L, has_final_norm=has_final_norm)

    # Cost estimate (matmuls + attention) for XLA's scheduler.
    flops = L * (2 * B * S * (4 * D * D + 2 * D * FF)
                 + 4 * B * H * S * S * Dh)
    transcendentals = L * B * H * S * S
    w_bytes = sum(int(w.size) * w.dtype.itemsize for w in weight_args)
    bytes_accessed = int(w_bytes + 2 * int(x.size) * x.dtype.itemsize)

    # VMEM budget: 2 layer-weight buffers (double-buffered stream) + activations,
    # with headroom; clamped below v7x's 64 MiB physical ceiling.
    per_layer_w_bytes = max(w_bytes // L, 1)
    act_bytes = 4 * (BC * S * D            # carried activation scratch
                     + 3 * BC * S * D      # qkv slab
                     + BC * S * S          # per-head score matrix
                     + BC * S * FF         # FFN hidden slab
                     + 2 * BC * S * D)     # x block + output block
    est = 2 * per_layer_w_bytes + 3 * act_bytes + (1 << 20)
    vmem_limit = int(min(max(est, 32 << 20), 64 << 20))

    return pl.pallas_call(
        kern,
        out_shape=jax.ShapeDtypeStruct((B, S, D), x.dtype),
        grid=(num_chunks, L),
        in_specs=in_specs,
        out_specs=pl.BlockSpec((BC, S, D), lambda c, l: (c, 0, 0)),
        scratch_shapes=[pltpu.VMEM((BC, S, D), jnp.float32)],
        compiler_params=pltpu.CompilerParams(
            dimension_semantics=("parallel", "arbitrary"),
            vmem_limit_bytes=vmem_limit),
        cost_estimate=pl.CostEstimate(flops=int(flops),
                                      transcendentals=int(transcendentals),
                                      bytes_accessed=bytes_accessed),
    )(*call_args)


def init_layer_params(key, d_model, dim_ff):
    """Deterministic synthetic parameters for one encoder layer.

    Linear weights are stored PRE-TRANSPOSED (in_dim, out_dim) so the kernel
    computes x @ W, matching PyTorch's x @ weight.T. 1-D params are (1, N)."""
    ks = jax.random.split(key, 8)
    scale = 0.05
    return {
        "w_qkv": jax.random.normal(ks[0], (d_model, 3 * d_model), jnp.float32) * scale,
        "b_qkv": jax.random.normal(ks[1], (1, 3 * d_model), jnp.float32) * scale,
        "w_out": jax.random.normal(ks[2], (d_model, d_model), jnp.float32) * scale,
        "b_out": jax.random.normal(ks[3], (1, d_model), jnp.float32) * scale,
        "g1": jnp.ones((1, d_model), jnp.float32),
        "be1": jnp.zeros((1, d_model), jnp.float32),
        "w1": jax.random.normal(ks[4], (d_model, dim_ff), jnp.float32) * scale,
        "b1": jax.random.normal(ks[5], (1, dim_ff), jnp.float32) * scale,
        "w2": jax.random.normal(ks[6], (dim_ff, d_model), jnp.float32) * scale,
        "b2": jax.random.normal(ks[7], (1, d_model), jnp.float32) * scale,
        "g2": jnp.ones((1, d_model), jnp.float32),
        "be2": jnp.zeros((1, d_model), jnp.float32),
    }


def prepare_fused_params(layer_params, nhead=NHEAD, matmul_dtype=jnp.bfloat16):
    """Stack per-layer params along a leading layer axis, fold 1/sqrt(head_dim)
    into the Q projection (free, wrapper-side), and store the matmul weights in
    bf16 for MXU-rate compute (biases / LayerNorm params stay f32)."""
    d_model = layer_params[0]["w_qkv"].shape[0]
    dh = d_model // nhead
    scale = 1.0 / math.sqrt(dh)

    def stack(name):
        return jnp.stack([p[name] for p in layer_params], axis=0)

    col_scale = jnp.concatenate(
        [jnp.full((d_model,), scale, jnp.float32),
         jnp.ones((2 * d_model,), jnp.float32)])

    fused = {
        "w_qkv": (stack("w_qkv") * col_scale[None, None, :]).astype(matmul_dtype),
        "b_qkv": stack("b_qkv") * col_scale[None, None, :],
        "w_out": stack("w_out").astype(matmul_dtype),
        "w1": stack("w1").astype(matmul_dtype),
        "w2": stack("w2").astype(matmul_dtype),
    }
    for n in ["b_out", "g1", "be1", "b1", "b2", "g2", "be2"]:
        fused[n] = stack(n)
    return fused


def _reference_forward(x, layer_params, norm_params, nhead=NHEAD):
    """Pure-JAX f32 reference (PyTorch TransformerEncoderLayer semantics, eval)."""
    def ln(v, g, b):
        mu = jnp.mean(v, -1, keepdims=True)
        var = jnp.mean((v - mu) ** 2, -1, keepdims=True)
        return (v - mu) / jnp.sqrt(var + EPS) * g + b

    B, S, D = x.shape
    dh = D // nhead
    out = x
    for p in layer_params:
        qkv = out @ p["w_qkv"] + p["b_qkv"]
        q, k, v = qkv[..., :D], qkv[..., D:2 * D], qkv[..., 2 * D:]
        q = q.reshape(B, S, nhead, dh).transpose(0, 2, 1, 3) / math.sqrt(dh)
        k = k.reshape(B, S, nhead, dh).transpose(0, 2, 1, 3)
        v = v.reshape(B, S, nhead, dh).transpose(0, 2, 1, 3)
        s = jnp.einsum('bhqd,bhkd->bhqk', q, k)
        pmat = jax.nn.softmax(s, axis=-1)
        a = jnp.einsum('bhqk,bhkd->bhqd', pmat, v)
        a = a.transpose(0, 2, 1, 3).reshape(B, S, D)
        attn = a @ p["w_out"] + p["b_out"]
        h1 = ln(out + attn, p["g1"], p["be1"])
        f = jax.nn.relu(h1 @ p["w1"] + p["b1"]) @ p["w2"] + p["b2"]
        out = ln(h1 + f, p["g2"], p["be2"])
    if norm_params is not None:
        out = ln(out, norm_params[0], norm_params[1])
    return out


if __name__ == "__main__":
    B, S, D, FF = 2, 8, 32, 64
    NUM_LAYERS = 2

    root = jax.random.PRNGKey(0)
    kx, *layer_keys = jax.random.split(root, NUM_LAYERS + 1)

    x = jax.random.normal(kx, (B, S, D), jnp.float32)       # (B, S, D) batch-first
    layer_params = [init_layer_params(k, D, FF) for k in layer_keys]
    # optional final norm (the `norm` argument) — a LayerNorm(d_model)
    norm_params = (jnp.ones((1, D), jnp.float32), jnp.zeros((1, D), jnp.float32))

    fused = prepare_fused_params(layer_params, NHEAD)
    out = transformer_layer_forward(x, fused, norm_params, nhead=NHEAD)
    jax.block_until_ready(out)
    assert out.shape == (B, S, D)

    ref = _reference_forward(x, layer_params, norm_params, NHEAD)
    err = float(jnp.max(jnp.abs(out - ref)))
    assert err < 5e-2, f"mismatch vs reference: {err}"
    print("KERNEL_OK")
</pallas_src>

<mosaic_0001>
module attributes {stable_mosaic.version = 11 : i64} {
  func.func @encoder_stack_kernel(%arg0: i32, %arg1: i32, %arg2: memref<2x8x32xf32, #tpu.memory_space<vmem>>, %arg3: memref<1x32x96xbf16, #tpu.memory_space<vmem>>, %arg4: memref<1x1x96xf32, #tpu.memory_space<vmem>>, %arg5: memref<1x32x32xbf16, #tpu.memory_space<vmem>>, %arg6: memref<1x1x32xf32, #tpu.memory_space<vmem>>, %arg7: memref<1x1x32xf32, #tpu.memory_space<vmem>>, %arg8: memref<1x1x32xf32, #tpu.memory_space<vmem>>, %arg9: memref<1x32x64xbf16, #tpu.memory_space<vmem>>, %arg10: memref<1x1x64xf32, #tpu.memory_space<vmem>>, %arg11: memref<1x64x32xbf16, #tpu.memory_space<vmem>>, %arg12: memref<1x1x32xf32, #tpu.memory_space<vmem>>, %arg13: memref<1x1x32xf32, #tpu.memory_space<vmem>>, %arg14: memref<1x1x32xf32, #tpu.memory_space<vmem>>, %arg15: memref<1x32xf32, #tpu.memory_space<vmem>>, %arg16: memref<1x32xf32, #tpu.memory_space<vmem>>, %arg17: memref<2x8x32xf32, #tpu.memory_space<vmem>>, %arg18: memref<2x8x32xf32, #tpu.memory_space<vmem>>) attributes {dimension_semantics = [#tpu.dimension_semantics<parallel>, #tpu.dimension_semantics<arbitrary>], iteration_bounds = array<i64: 1, 2>, scalar_prefetch = 0 : i64, scratch_operands = 1 : i64, tpu.core_type = #tpu.core_type<tc>, window_params = [{transform_indices = @transform_0, window_bounds = array<i64: 2, 8, 32>}, {transform_indices = @transform_1, window_bounds = array<i64: 1, 32, 96>}, {transform_indices = @transform_2, window_bounds = array<i64: 1, 1, 96>}, {transform_indices = @transform_3, window_bounds = array<i64: 1, 32, 32>}, {transform_indices = @transform_4, window_bounds = array<i64: 1, 1, 32>}, {transform_indices = @transform_5, window_bounds = array<i64: 1, 1, 32>}, {transform_indices = @transform_6, window_bounds = array<i64: 1, 1, 32>}, {transform_indices = @transform_7, window_bounds = array<i64: 1, 32, 64>}, {transform_indices = @transform_8, window_bounds = array<i64: 1, 1, 64>}, {transform_indices = @transform_9, window_bounds = array<i64: 1, 64, 32>}, {transform_indices = @transform_10, window_bounds = array<i64: 1, 1, 32>}, {transform_indices = @transform_11, window_bounds = array<i64: 1, 1, 32>}, {transform_indices = @transform_12, window_bounds = array<i64: 1, 1, 32>}, {pipeline_mode = #tpu.pipeline_mode<synchronous>, transform_indices = @transform_13, window_bounds = array<i64: 1, 32>}, {pipeline_mode = #tpu.pipeline_mode<synchronous>, transform_indices = @transform_14, window_bounds = array<i64: 1, 32>}, {transform_indices = @transform_15, window_bounds = array<i64: 2, 8, 32>}]} {
    %c0_i32 = arith.constant 0 : i32
    %0 = arith.cmpi eq, %arg1, %c0_i32 : i32
    %1 = arith.extui %0 : i1 to i32
    %c0_i32_0 = arith.constant 0 : i32
    %2 = arith.cmpi ne, %1, %c0_i32_0 : i32
    scf.if %2 {
      %c0_73 = arith.constant 0 : index
      %c0_74 = arith.constant 0 : index
      %c0_75 = arith.constant 0 : index
      %191 = vector.load %arg2[%c0_73, %c0_74, %c0_75] : memref<2x8x32xf32, #tpu.memory_space<vmem>>, vector<2x8x32xf32>
      %c0_76 = arith.constant 0 : index
      %c0_77 = arith.constant 0 : index
      %c0_78 = arith.constant 0 : index
      %192 = vector.load %arg18[%c0_76, %c0_77, %c0_78] : memref<2x8x32xf32, #tpu.memory_space<vmem>>, vector<2x8x32xf32>
      tpu.vector_store %arg18[%c0_76, %c0_77, %c0_78], %191 {strides = array<i32>} : memref<2x8x32xf32, #tpu.memory_space<vmem>>, vector<2x8x32xf32>,
    } else {
    }
    %c0 = arith.constant 0 : index
    %c0_1 = arith.constant 0 : index
    %c0_2 = arith.constant 0 : index
    %3 = vector.load %arg3[%c0, %c0_1, %c0_2] : memref<1x32x96xbf16, #tpu.memory_space<vmem>>, vector<1x32x96xbf16>
    %4 = vector.shape_cast %3 : vector<1x32x96xbf16> to vector<32x96xbf16>
    %c0_3 = arith.constant 0 : index
    %c0_4 = arith.constant 0 : index
    %c0_5 = arith.constant 0 : index
    %5 = vector.load %arg4[%c0_3, %c0_4, %c0_5] : memref<1x1x96xf32, #tpu.memory_space<vmem>>, vector<1x1x96xf32>
    %6 = vector.shape_cast %5 : vector<1x1x96xf32> to vector<1x96xf32>
    %c0_6 = arith.constant 0 : index
    %c0_7 = arith.constant 0 : index
    %c0_8 = arith.constant 0 : index
    %7 = vector.load %arg5[%c0_6, %c0_7, %c0_8] : memref<1x32x32xbf16, #tpu.memory_space<vmem>>, vector<1x32x32xbf16>
    %8 = vector.shape_cast %7 : vector<1x32x32xbf16> to vector<32x32xbf16>
    %c0_9 = arith.constant 0 : index
    %c0_10 = arith.constant 0 : index
    %c0_11 = arith.constant 0 : index
    %9 = vector.load %arg6[%c0_9, %c0_10, %c0_11] : memref<1x1x32xf32, #tpu.memory_space<vmem>>, vector<1x1x32xf32>
    %10 = vector.shape_cast %9 : vector<1x1x32xf32> to vector<1x32xf32>
    %c0_12 = arith.constant 0 : index
    %c0_13 = arith.constant 0 : index
    %c0_14 = arith.constant 0 : index
    %11 = vector.load %arg7[%c0_12, %c0_13, %c0_14] : memref<1x1x32xf32, #tpu.memory_space<vmem>>, vector<1x1x32xf32>
    %12 = vector.shape_cast %11 : vector<1x1x32xf32> to vector<1x32xf32>
    %c0_15 = arith.constant 0 : index
    %c0_16 = arith.constant 0 : index
    %c0_17 = arith.constant 0 : index
    %13 = vector.load %arg8[%c0_15, %c0_16, %c0_17] : memref<1x1x32xf32, #tpu.memory_space<vmem>>, vector<1x1x32xf32>
    %14 = vector.shape_cast %13 : vector<1x1x32xf32> to vector<1x32xf32>
    %c0_18 = arith.constant 0 : index
    %c0_19 = arith.constant 0 : index
    %c0_20 = arith.constant 0 : index
    %15 = vector.load %arg9[%c0_18, %c0_19, %c0_20] : memref<1x32x64xbf16, #tpu.memory_space<vmem>>, vector<1x32x64xbf16>
    %16 = vector.shape_cast %15 : vector<1x32x64xbf16> to vector<32x64xbf16>
    %c0_21 = arith.constant 0 : index
    %c0_22 = arith.constant 0 : index
    %c0_23 = arith.constant 0 : index
    %17 = vector.load %arg10[%c0_21, %c0_22, %c0_23] : memref<1x1x64xf32, #tpu.memory_space<vmem>>, vector<1x1x64xf32>
    %18 = vector.shape_cast %17 : vector<1x1x64xf32> to vector<1x64xf32>
    %c0_24 = arith.constant 0 : index
    %c0_25 = arith.constant 0 : index
    %c0_26 = arith.constant 0 : index
    %19 = vector.load %arg11[%c0_24, %c0_25, %c0_26] : memref<1x64x32xbf16, #tpu.memory_space<vmem>>, vector<1x64x32xbf16>
    %20 = vector.shape_cast %19 : vector<1x64x32xbf16> to vector<64x32xbf16>
    %c0_27 = arith.constant 0 : index
    %c0_28 = arith.constant 0 : index
    %c0_29 = arith.constant 0 : index
    %21 = vector.load %arg12[%c0_27, %c0_28, %c0_29] : memref<1x1x32xf32, #tpu.memory_space<vmem>>, vector<1x1x32xf32>
    %22 = vector.shape_cast %21 : vector<1x1x32xf32> to vector<1x32xf32>
    %c0_30 = arith.constant 0 : index
    %c0_31 = arith.constant 0 : index
    %c0_32 = arith.constant 0 : index
    %23 = vector.load %arg13[%c0_30, %c0_31, %c0_32] : memref<1x1x32xf32, #tpu.memory_space<vmem>>, vector<1x1x32xf32>
    %24 = vector.shape_cast %23 : vector<1x1x32xf32> to vector<1x32xf32>
    %c0_33 = arith.constant 0 : index
    %c0_34 = arith.constant 0 : index
    %c0_35 = arith.constant 0 : index
    %25 = vector.load %arg14[%c0_33, %c0_34, %c0_35] : memref<1x1x32xf32, #tpu.memory_space<vmem>>, vector<1x1x32xf32>
    %26 = vector.shape_cast %25 : vector<1x1x32xf32> to vector<1x32xf32>
    %c0_36 = arith.constant 0 : index
    %c0_37 = arith.constant 0 : index
    %c0_38 = arith.constant 0 : index
    %27 = vector.load %arg18[%c0_36, %c0_37, %c0_38] : memref<2x8x32xf32, #tpu.memory_space<vmem>>, vector<2x8x32xf32>
    %28 = vector.shape_cast %27 : vector<2x8x32xf32> to vector<16x32xf32>
    %29 = arith.truncf %28 : vector<16x32xf32> to vector<16x32xbf16>
    %cst = arith.constant dense<0.000000e+00> : vector<16x96xf32>
    %30 = tpu.matmul %29, %4, %cst {dimension_numbers = #tpu.dot_dimension_numbers<[1], [0], [0], [1], [0, 0, 1, 1], [], []>} : vector<16x32xbf16>, vector<32x96xbf16>, vector<16x96xf32> -> vector<16x96xf32>
    %31 = vector.broadcast %6 : vector<1x96xf32> to vector<16x96xf32>
    %32 = arith.addf %30, %31 : vector<16x96xf32>
    %33 = vector.extract_strided_slice %32 {offsets = [0, 0], sizes = [16, 8], strides = [1, 1]} : vector<16x96xf32> to vector<16x8xf32>
    %34 = vector.shape_cast %33 : vector<16x8xf32> to vector<2x8x8xf32>
    %35 = vector.extract_strided_slice %32 {offsets = [0, 32], sizes = [16, 8], strides = [1, 1]} : vector<16x96xf32> to vector<16x8xf32>
    %36 = vector.shape_cast %35 : vector<16x8xf32> to vector<2x8x8xf32>
    %37 = vector.extract_strided_slice %32 {offsets = [0, 64], sizes = [16, 8], strides = [1, 1]} : vector<16x96xf32> to vector<16x8xf32>
    %38 = vector.shape_cast %37 : vector<16x8xf32> to vector<2x8x8xf32>
    %39 = arith.truncf %34 : vector<2x8x8xf32> to vector<2x8x8xbf16>
    %40 = arith.truncf %36 : vector<2x8x8xf32> to vector<2x8x8xbf16>
    "tpu.trace_start"() <{level = 10 : i32, message = "bqd,bkd->bqk"}> : () -> ()
    %cst_39 = arith.constant dense<0.000000e+00> : vector<2x8x8xf32>
    %41 = tpu.matmul %39, %40, %cst_39 {dimension_numbers = #tpu.dot_dimension_numbers<[2], [2], [1], [1], [0, 0, 0, 1, 1, 1], [0], [0]>} : vector<2x8x8xbf16>, vector<2x8x8xbf16>, vector<2x8x8xf32> -> vector<2x8x8xf32>
    "tpu.trace_stop"() : () -> ()
    %cst_40 = arith.constant dense<0xFF800000> : vector<2x8xf32>
    %42 = vector.multi_reduction <maximumf>, %41, %cst_40 [2] : vector<2x8x8xf32> to vector<2x8xf32>
    %43 = vector.shape_cast %42 : vector<2x8xf32> to vector<2x8x1xf32>
    %44 = vector.broadcast %43 : vector<2x8x1xf32> to vector<2x8x8xf32>
    %45 = arith.subf %41, %44 : vector<2x8x8xf32>
    %46 = math.exp %45 : vector<2x8x8xf32>
    %cst_41 = arith.constant dense<0.000000e+00> : vector<2x8xf32>
    %47 = vector.multi_reduction <add>, %46, %cst_41 [2] : vector<2x8x8xf32> to vector<2x8xf32>
    %48 = vector.shape_cast %47 : vector<2x8xf32> to vector<2x8x1xf32>
    %49 = tpu.reciprocal %48 : vector<2x8x1xf32> -> vector<2x8x1xf32>
    %50 = vector.broadcast %49 : vector<2x8x1xf32> to vector<2x8x8xf32>
    %51 = arith.mulf %46, %50 : vector<2x8x8xf32>
    %52 = arith.truncf %51 : vector<2x8x8xf32> to vector<2x8x8xbf16>
    %53 = arith.truncf %38 : vector<2x8x8xf32> to vector<2x8x8xbf16>
    "tpu.trace_start"() <{level = 10 : i32, message = "bqk,bkd->bqd"}> : () -> ()
    %cst_42 = arith.constant dense<0.000000e+00> : vector<2x8x8xf32>
    %54 = tpu.matmul %52, %53, %cst_42 {dimension_numbers = #tpu.dot_dimension_numbers<[2], [1], [1], [2], [0, 0, 0, 1, 1, 2], [0], [0]>} : vector<2x8x8xbf16>, vector<2x8x8xbf16>, vector<2x8x8xf32> -> vector<2x8x8xf32>
    "tpu.trace_stop"() : () -> ()
    %55 = vector.shape_cast %54 : vector<2x8x8xf32> to vector<16x8xf32>
    %56 = vector.extract_strided_slice %32 {offsets = [0, 8], sizes = [16, 8], strides = [1, 1]} : vector<16x96xf32> to vector<16x8xf32>
    %57 = vector.shape_cast %56 : vector<16x8xf32> to vector<2x8x8xf32>
    %58 = vector.extract_strided_slice %32 {offsets = [0, 40], sizes = [16, 8], strides = [1, 1]} : vector<16x96xf32> to vector<16x8xf32>
    %59 = vector.shape_cast %58 : vector<16x8xf32> to vector<2x8x8xf32>
    %60 = vector.extract_strided_slice %32 {offsets = [0, 72], sizes = [16, 8], strides = [1, 1]} : vector<16x96xf32> to vector<16x8xf32>
    %61 = vector.shape_cast %60 : vector<16x8xf32> to vector<2x8x8xf32>
    %62 = arith.truncf %57 : vector<2x8x8xf32> to vector<2x8x8xbf16>
    %63 = arith.truncf %59 : vector<2x8x8xf32> to vector<2x8x8xbf16>
    "tpu.trace_start"() <{level = 10 : i32, message = "bqd,bkd->bqk"}> : () -> ()
    %cst_43 = arith.constant dense<0.000000e+00> : vector<2x8x8xf32>
    %64 = tpu.matmul %62, %63, %cst_43 {dimension_numbers = #tpu.dot_dimension_numbers<[2], [2], [1], [1], [0, 0, 0, 1, 1, 1], [0], [0]>} : vector<2x8x8xbf16>, vector<2x8x8xbf16>, vector<2x8x8xf32> -> vector<2x8x8xf32>
    "tpu.trace_stop"() : () -> ()
    %cst_44 = arith.constant dense<0xFF800000> : vector<2x8xf32>
    %65 = vector.multi_reduction <maximumf>, %64, %cst_44 [2] : vector<2x8x8xf32> to vector<2x8xf32>
    %66 = vector.shape_cast %65 : vector<2x8xf32> to vector<2x8x1xf32>
    %67 = vector.broadcast %66 : vector<2x8x1xf32> to vector<2x8x8xf32>
    %68 = arith.subf %64, %67 : vector<2x8x8xf32>
    %69 = math.exp %68 : vector<2x8x8xf32>
    %cst_45 = arith.constant dense<0.000000e+00> : vector<2x8xf32>
    %70 = vector.multi_reduction <add>, %69, %cst_45 [2] : vector<2x8x8xf32> to vector<2x8xf32>
    %71 = vector.shape_cast %70 : vector<2x8xf32> to vector<2x8x1xf32>
    %72 = tpu.reciprocal %71 : vector<2x8x1xf32> -> vector<2x8x1xf32>
    %73 = vector.broadcast %72 : vector<2x8x1xf32> to vector<2x8x8xf32>
    %74 = arith.mulf %69, %73 : vector<2x8x8xf32>
    %75 = arith.truncf %74 : vector<2x8x8xf32> to vector<2x8x8xbf16>
    %76 = arith.truncf %61 : vector<2x8x8xf32> to vector<2x8x8xbf16>
    "tpu.trace_start"() <{level = 10 : i32, message = "bqk,bkd->bqd"}> : () -> ()
    %cst_46 = arith.constant dense<0.000000e+00> : vector<2x8x8xf32>
    %77 = tpu.matmul %75, %76, %cst_46 {dimension_numbers = #tpu.dot_dimension_numbers<[2], [1], [1], [2], [0, 0, 0, 1, 1, 2], [0], [0]>} : vector<2x8x8xbf16>, vector<2x8x8xbf16>, vector<2x8x8xf32> -> vector<2x8x8xf32>
    "tpu.trace_stop"() : () -> ()
    %78 = vector.shape_cast %77 : vector<2x8x8xf32> to vector<16x8xf32>
    %79 = vector.extract_strided_slice %32 {offsets = [0, 16], sizes = [16, 8], strides = [1, 1]} : vector<16x96xf32> to vector<16x8xf32>
    %80 = vector.shape_cast %79 : vector<16x8xf32> to vector<2x8x8xf32>
    %81 = vector.extract_strided_slice %32 {offsets = [0, 48], sizes = [16, 8], strides = [1, 1]} : vector<16x96xf32> to vector<16x8xf32>
    %82 = vector.shape_cast %81 : vector<16x8xf32> to vector<2x8x8xf32>
    %83 = vector.extract_strided_slice %32 {offsets = [0, 80], sizes = [16, 8], strides = [1, 1]} : vector<16x96xf32> to vector<16x8xf32>
    %84 = vector.shape_cast %83 : vector<16x8xf32> to vector<2x8x8xf32>
    %85 = arith.truncf %80 : vector<2x8x8xf32> to vector<2x8x8xbf16>
    %86 = arith.truncf %82 : vector<2x8x8xf32> to vector<2x8x8xbf16>
    "tpu.trace_start"() <{level = 10 : i32, message = "bqd,bkd->bqk"}> : () -> ()
    %cst_47 = arith.constant dense<0.000000e+00> : vector<2x8x8xf32>
    %87 = tpu.matmul %85, %86, %cst_47 {dimension_numbers = #tpu.dot_dimension_numbers<[2], [2], [1], [1], [0, 0, 0, 1, 1, 1], [0], [0]>} : vector<2x8x8xbf16>, vector<2x8x8xbf16>, vector<2x8x8xf32> -> vector<2x8x8xf32>
    "tpu.trace_stop"() : () -> ()
    %cst_48 = arith.constant dense<0xFF800000> : vector<2x8xf32>
    %88 = vector.multi_reduction <maximumf>, %87, %cst_48 [2] : vector<2x8x8xf32> to vector<2x8xf32>
    %89 = vector.shape_cast %88 : vector<2x8xf32> to vector<2x8x1xf32>
    %90 = vector.broadcast %89 : vector<2x8x1xf32> to vector<2x8x8xf32>
    %91 = arith.subf %87, %90 : vector<2x8x8xf32>
    %92 = math.exp %91 : vector<2x8x8xf32>
    %cst_49 = arith.constant dense<0.000000e+00> : vector<2x8xf32>
    %93 = vector.multi_reduction <add>, %92, %cst_49 [2] : vector<2x8x8xf32> to vector<2x8xf32>
    %94 = vector.shape_cast %93 : vector<2x8xf32> to vector<2x8x1xf32>
    %95 = tpu.reciprocal %94 : vector<2x8x1xf32> -> vector<2x8x1xf32>
    %96 = vector.broadcast %95 : vector<2x8x1xf32> to vector<2x8x8xf32>
    %97 = arith.mulf %92, %96 : vector<2x8x8xf32>
    %98 = arith.truncf %97 : vector<2x8x8xf32> to vector<2x8x8xbf16>
    %99 = arith.truncf %84 : vector<2x8x8xf32> to vector<2x8x8xbf16>
    "tpu.trace_start"() <{level = 10 : i32, message = "bqk,bkd->bqd"}> : () -> ()
    %cst_50 = arith.constant dense<0.000000e+00> : vector<2x8x8xf32>
    %100 = tpu.matmul %98, %99, %cst_50 {dimension_numbers = #tpu.dot_dimension_numbers<[2], [1], [1], [2], [0, 0, 0, 1, 1, 2], [0], [0]>} : vector<2x8x8xbf16>, vector<2x8x8xbf16>, vector<2x8x8xf32> -> vector<2x8x8xf32>
    "tpu.trace_stop"() : () -> ()
    %101 = vector.shape_cast %100 : vector<2x8x8xf32> to vector<16x8xf32>
    %102 = vector.extract_strided_slice %32 {offsets = [0, 24], sizes = [16, 8], strides = [1, 1]} : vector<16x96xf32> to vector<16x8xf32>
    %103 = vector.shape_cast %102 : vector<16x8xf32> to vector<2x8x8xf32>
    %104 = vector.extract_strided_slice %32 {offsets = [0, 56], sizes = [16, 8], strides = [1, 1]} : vector<16x96xf32> to vector<16x8xf32>
    %105 = vector.shape_cast %104 : vector<16x8xf32> to vector<2x8x8xf32>
    %106 = vector.extract_strided_slice %32 {offsets = [0, 88], sizes = [16, 8], strides = [1, 1]} : vector<16x96xf32> to vector<16x8xf32>
    %107 = vector.shape_cast %106 : vector<16x8xf32> to vector<2x8x8xf32>
    %108 = arith.truncf %103 : vector<2x8x8xf32> to vector<2x8x8xbf16>
    %109 = arith.truncf %105 : vector<2x8x8xf32> to vector<2x8x8xbf16>
    "tpu.trace_start"() <{level = 10 : i32, message = "bqd,bkd->bqk"}> : () -> ()
    %cst_51 = arith.constant dense<0.000000e+00> : vector<2x8x8xf32>
    %110 = tpu.matmul %108, %109, %cst_51 {dimension_numbers = #tpu.dot_dimension_numbers<[2], [2], [1], [1], [0, 0, 0, 1, 1, 1], [0], [0]>} : vector<2x8x8xbf16>, vector<2x8x8xbf16>, vector<2x8x8xf32> -> vector<2x8x8xf32>
    "tpu.trace_stop"() : () -> ()
    %cst_52 = arith.constant dense<0xFF800000> : vector<2x8xf32>
    %111 = vector.multi_reduction <maximumf>, %110, %cst_52 [2] : vector<2x8x8xf32> to vector<2x8xf32>
    %112 = vector.shape_cast %111 : vector<2x8xf32> to vector<2x8x1xf32>
    %113 = vector.broadcast %112 : vector<2x8x1xf32> to vector<2x8x8xf32>
    %114 = arith.subf %110, %113 : vector<2x8x8xf32>
    %115 = math.exp %114 : vector<2x8x8xf32>
    %cst_53 = arith.constant dense<0.000000e+00> : vector<2x8xf32>
    %116 = vector.multi_reduction <add>, %115, %cst_53 [2] : vector<2x8x8xf32> to vector<2x8xf32>
    %117 = vector.shape_cast %116 : vector<2x8xf32> to vector<2x8x1xf32>
    %118 = tpu.reciprocal %117 : vector<2x8x1xf32> -> vector<2x8x1xf32>
    %119 = vector.broadcast %118 : vector<2x8x1xf32> to vector<2x8x8xf32>
    %120 = arith.mulf %115, %119 : vector<2x8x8xf32>
    %121 = arith.truncf %120 : vector<2x8x8xf32> to vector<2x8x8xbf16>
    %122 = arith.truncf %107 : vector<2x8x8xf32> to vector<2x8x8xbf16>
    "tpu.trace_start"() <{level = 10 : i32, message = "bqk,bkd->bqd"}> : () -> ()
    %cst_54 = arith.constant dense<0.000000e+00> : vector<2x8x8xf32>
    %123 = tpu.matmul %121, %122, %cst_54 {dimension_numbers = #tpu.dot_dimension_numbers<[2], [1], [1], [2], [0, 0, 0, 1, 1, 2], [0], [0]>} : vector<2x8x8xbf16>, vector<2x8x8xbf16>, vector<2x8x8xf32> -> vector<2x8x8xf32>
    "tpu.trace_stop"() : () -> ()
    %124 = vector.shape_cast %123 : vector<2x8x8xf32> to vector<16x8xf32>
    %125 = tpu.concatenate %55, %78, %101, %124 in 1 : vector<16x8xf32>, vector<16x8xf32>, vector<16x8xf32>, vector<16x8xf32> -> vector<16x32xf32>
    %126 = arith.truncf %125 : vector<16x32xf32> to vector<16x32xbf16>
    %cst_55 = arith.constant dense<0.000000e+00> : vector<16x32xf32>
    %127 = tpu.matmul %126, %8, %cst_55 {dimension_numbers = #tpu.dot_dimension_numbers<[1], [0], [0], [1], [0, 0, 1, 1], [], []>} : vector<16x32xbf16>, vector<32x32xbf16>, vector<16x32xf32> -> vector<16x32xf32>
    %128 = vector.broadcast %10 : vector<1x32xf32> to vector<16x32xf32>
    %129 = arith.addf %127, %128 : vector<16x32xf32>
    %130 = arith.addf %28, %129 : vector<16x32xf32>
    %cst_56 = arith.constant dense<0.000000e+00> : vector<16xf32>
    %131 = vector.multi_reduction <add>, %130, %cst_56 [1] : vector<16x32xf32> to vector<16xf32>
    %132 = vector.shape_cast %131 : vector<16xf32> to vector<16x1xf32>
    %cst_57 = arith.constant 3.200000e+01 : f32
    %133 = vector.broadcast %cst_57 : f32 to vector<16x1xf32>
    %134 = arith.divf %132, %133 : vector<16x1xf32>
    %135 = vector.broadcast %134 : vector<16x1xf32> to vector<16x32xf32>
    %136 = arith.subf %130, %135 : vector<16x32xf32>
    %137 = arith.mulf %136, %136 : vector<16x32xf32>
    %cst_58 = arith.constant dense<0.000000e+00> : vector<16xf32>
    %138 = vector.multi_reduction <add>, %137, %cst_58 [1] : vector<16x32xf32> to vector<16xf32>
    %139 = vector.shape_cast %138 : vector<16xf32> to vector<16x1xf32>
    %cst_59 = arith.constant 3.200000e+01 : f32
    %140 = vector.broadcast %cst_59 : f32 to vector<16x1xf32>
    %141 = arith.divf %139, %140 : vector<16x1xf32>
    %142 = vector.broadcast %134 : vector<16x1xf32> to vector<16x32xf32>
    %143 = arith.subf %130, %142 : vector<16x32xf32>
    %cst_60 = arith.constant 9.99999974E-6 : f32
    %144 = vector.broadcast %cst_60 : f32 to vector<16x1xf32>
    %145 = arith.addf %141, %144 : vector<16x1xf32>
    %146 = math.rsqrt %145 : vector<16x1xf32>
    %147 = vector.broadcast %146 : vector<16x1xf32> to vector<16x32xf32>
    %148 = arith.mulf %143, %147 : vector<16x32xf32>
    %149 = vector.broadcast %12 : vector<1x32xf32> to vector<16x32xf32>
    %150 = arith.mulf %148, %149 : vector<16x32xf32>
    %151 = vector.broadcast %14 : vector<1x32xf32> to vector<16x32xf32>
    %152 = arith.addf %150, %151 : vector<16x32xf32>
    %153 = arith.truncf %152 : vector<16x32xf32> to vector<16x32xbf16>
    %cst_61 = arith.constant dense<0.000000e+00> : vector<16x64xf32>
    %154 = tpu.matmul %153, %16, %cst_61 {dimension_numbers = #tpu.dot_dimension_numbers<[1], [0], [0], [1], [0, 0, 1, 1], [], []>} : vector<16x32xbf16>, vector<32x64xbf16>, vector<16x64xf32> -> vector<16x64xf32>
    %155 = vector.broadcast %18 : vector<1x64xf32> to vector<16x64xf32>
    %156 = arith.addf %154, %155 : vector<16x64xf32>
    %cst_62 = arith.constant 0.000000e+00 : f32
    %157 = vector.broadcast %cst_62 : f32 to vector<16x64xf32>
    %158 = arith.maximumf %156, %157 : vector<16x64xf32>
    %159 = arith.truncf %158 : vector<16x64xf32> to vector<16x64xbf16>
    %cst_63 = arith.constant dense<0.000000e+00> : vector<16x32xf32>
    %160 = tpu.matmul %159, %20, %cst_63 {dimension_numbers = #tpu.dot_dimension_numbers<[1], [0], [0], [1], [0, 0, 1, 1], [], []>} : vector<16x64xbf16>, vector<64x32xbf16>, vector<16x32xf32> -> vector<16x32xf32>
    %161 = vector.broadcast %22 : vector<1x32xf32> to vector<16x32xf32>
    %162 = arith.addf %160, %161 : vector<16x32xf32>
    %163 = arith.addf %152, %162 : vector<16x32xf32>
    %cst_64 = arith.constant dense<0.000000e+00> : vector<16xf32>
    %164 = vector.multi_reduction <add>, %163, %cst_64 [1] : vector<16x32xf32> to vector<16xf32>
    %165 = vector.shape_cast %164 : vector<16xf32> to vector<16x1xf32>
    %cst_65 = arith.constant 3.200000e+01 : f32
    %166 = vector.broadcast %cst_65 : f32 to vector<16x1xf32>
    %167 = arith.divf %165, %166 : vector<16x1xf32>
    %168 = vector.broadcast %167 : vector<16x1xf32> to vector<16x32xf32>
    %169 = arith.subf %163, %168 : vector<16x32xf32>
    %170 = arith.mulf %169, %169 : vector<16x32xf32>
    %cst_66 = arith.constant dense<0.000000e+00> : vector<16xf32>
    %171 = vector.multi_reduction <add>, %170, %cst_66 [1] : vector<16x32xf32> to vector<16xf32>
    %172 = vector.shape_cast %171 : vector<16xf32> to vector<16x1xf32>
    %cst_67 = arith.constant 3.200000e+01 : f32
    %173 = vector.broadcast %cst_67 : f32 to vector<16x1xf32>
    %174 = arith.divf %172, %173 : vector<16x1xf32>
    %175 = vector.broadcast %167 : vector<16x1xf32> to vector<16x32xf32>
    %176 = arith.subf %163, %175 : vector<16x32xf32>
    %cst_68 = arith.constant 9.99999974E-6 : f32
    %177 = vector.broadcast %cst_68 : f32 to vector<16x1xf32>
    %178 = arith.addf %174, %177 : vector<16x1xf32>
    %179 = math.rsqrt %178 : vector<16x1xf32>
    %180 = vector.broadcast %179 : vector<16x1xf32> to vector<16x32xf32>
    %181 = arith.mulf %176, %180 : vector<16x32xf32>
    %182 = vector.broadcast %24 : vector<1x32xf32> to vector<16x32xf32>
    %183 = arith.mulf %181, %182 : vector<16x32xf32>
    %184 = vector.broadcast %26 : vector<1x32xf32> to vector<16x32xf32>
    %185 = arith.addf %183, %184 : vector<16x32xf32>
    %186 = vector.shape_cast %185 : vector<16x32xf32> to vector<2x8x32xf32>
    %c0_69 = arith.constant 0 : index
    %c0_70 = arith.constant 0 : index
    %c0_71 = arith.constant 0 : index
    %187 = vector.load %arg18[%c0_69, %c0_70, %c0_71] : memref<2x8x32xf32, #tpu.memory_space<vmem>>, vector<2x8x32xf32>
    tpu.vector_store %arg18[%c0_69, %c0_70, %c0_71], %186 {strides = array<i32>} : memref<2x8x32xf32, #tpu.memory_space<vmem>>, vector<2x8x32xf32>,
    %c1_i32 = arith.constant 1 : i32
    %188 = arith.cmpi eq, %arg1, %c1_i32 : i32
    %189 = arith.extui %188 : i1 to i32
    %c0_i32_72 = arith.constant 0 : i32
    %190 = arith.cmpi ne, %189, %c0_i32_72 : i32
    scf.if %190 {
      %c0_73 = arith.constant 0 : index
      %c0_74 = arith.constant 0 : index
      %191 = vector.load %arg15[%c0_73, %c0_74] : memref<1x32xf32, #tpu.memory_space<vmem>>, vector<1x32xf32>
      %c0_75 = arith.constant 0 : index
      %c0_76 = arith.constant 0 : index
      %192 = vector.load %arg16[%c0_75, %c0_76] : memref<1x32xf32, #tpu.memory_space<vmem>>, vector<1x32xf32>
      %cst_77 = arith.constant dense<0.000000e+00> : vector<16xf32>
      %193 = vector.multi_reduction <add>, %185, %cst_77 [1] : vector<16x32xf32> to vector<16xf32>
      %194 = vector.shape_cast %193 : vector<16xf32> to vector<16x1xf32>
      %cst_78 = arith.constant 3.200000e+01 : f32
      %195 = vector.broadcast %cst_78 : f32 to vector<16x1xf32>
      %196 = arith.divf %194, %195 : vector<16x1xf32>
      %197 = vector.broadcast %196 : vector<16x1xf32> to vector<16x32xf32>
      %198 = arith.subf %185, %197 : vector<16x32xf32>
      %199 = arith.mulf %198, %198 : vector<16x32xf32>
      %cst_79 = arith.constant dense<0.000000e+00> : vector<16xf32>
      %200 = vector.multi_reduction <add>, %199, %cst_79 [1] : vector<16x32xf32> to vector<16xf32>
      %201 = vector.shape_cast %200 : vector<16xf32> to vector<16x1xf32>
      %cst_80 = arith.constant 3.200000e+01 : f32
      %202 = vector.broadcast %cst_80 : f32 to vector<16x1xf32>
      %203 = arith.divf %201, %202 : vector<16x1xf32>
      %204 = vector.broadcast %196 : vector<16x1xf32> to vector<16x32xf32>
      %205 = arith.subf %185, %204 : vector<16x32xf32>
      %cst_81 = arith.constant 9.99999974E-6 : f32
      %206 = vector.broadcast %cst_81 : f32 to vector<16x1xf32>
      %207 = arith.addf %203, %206 : vector<16x1xf32>
      %208 = math.rsqrt %207 : vector<16x1xf32>
      %209 = vector.broadcast %208 : vector<16x1xf32> to vector<16x32xf32>
      %210 = arith.mulf %205, %209 : vector<16x32xf32>
      %211 = vector.broadcast %191 : vector<1x32xf32> to vector<16x32xf32>
      %212 = arith.mulf %210, %211 : vector<16x32xf32>
      %213 = vector.broadcast %192 : vector<1x32xf32> to vector<16x32xf32>
      %214 = arith.addf %212, %213 : vector<16x32xf32>
      %215 = vector.shape_cast %214 : vector<16x32xf32> to vector<2x8x32xf32>
      %c0_82 = arith.constant 0 : index
      %c0_83 = arith.constant 0 : index
      %c0_84 = arith.constant 0 : index
      %216 = vector.load %arg17[%c0_82, %c0_83, %c0_84] : memref<2x8x32xf32, #tpu.memory_space<vmem>>, vector<2x8x32xf32>
      tpu.vector_store %arg17[%c0_82, %c0_83, %c0_84], %215 {strides = array<i32>} : memref<2x8x32xf32, #tpu.memory_space<vmem>>, vector<2x8x32xf32>,
    } else {
    }
    return
  }
  func.func @transform_0(%arg0: i32, %arg1: i32) -> (i32, i32, i32) {
    %c0_i32 = arith.constant 0 : i32
    %c0_i32_0 = arith.constant 0 : i32
    %c0_i32_1 = arith.constant 0 : i32
    return %arg0, %c0_i32, %c0_i32_0 : i32, i32, i32
  }
  func.func @transform_1(%arg0: i32, %arg1: i32) -> (i32, i32, i32) {
    %c0_i32 = arith.constant 0 : i32
    %c0_i32_0 = arith.constant 0 : i32
    %c0_i32_1 = arith.constant 0 : i32
    return %arg1, %c0_i32, %c0_i32_0 : i32, i32, i32
  }
  func.func @transform_2(%arg0: i32, %arg1: i32) -> (i32, i32, i32) {
    %c0_i32 = arith.constant 0 : i32
    %c0_i32_0 = arith.constant 0 : i32
    %c0_i32_1 = arith.constant 0 : i32
    return %arg1, %c0_i32, %c0_i32_0 : i32, i32, i32
  }
  func.func @transform_3(%arg0: i32, %arg1: i32) -> (i32, i32, i32) {
    %c0_i32 = arith.constant 0 : i32
    %c0_i32_0 = arith.constant 0 : i32
    %c0_i32_1 = arith.constant 0 : i32
    return %arg1, %c0_i32, %c0_i32_0 : i32, i32, i32
  }
  func.func @transform_4(%arg0: i32, %arg1: i32) -> (i32, i32, i32) {
    %c0_i32 = arith.constant 0 : i32
    %c0_i32_0 = arith.constant 0 : i32
    %c0_i32_1 = arith.constant 0 : i32
    return %arg1, %c0_i32, %c0_i32_0 : i32, i32, i32
  }
  func.func @transform_5(%arg0: i32, %arg1: i32) -> (i32, i32, i32) {
    %c0_i32 = arith.constant 0 : i32
    %c0_i32_0 = arith.constant 0 : i32
    %c0_i32_1 = arith.constant 0 : i32
    return %arg1, %c0_i32, %c0_i32_0 : i32, i32, i32
  }
  func.func @transform_6(%arg0: i32, %arg1: i32) -> (i32, i32, i32) {
    %c0_i32 = arith.constant 0 : i32
    %c0_i32_0 = arith.constant 0 : i32
    %c0_i32_1 = arith.constant 0 : i32
    return %arg1, %c0_i32, %c0_i32_0 : i32, i32, i32
  }
  func.func @transform_7(%arg0: i32, %arg1: i32) -> (i32, i32, i32) {
    %c0_i32 = arith.constant 0 : i32
    %c0_i32_0 = arith.constant 0 : i32
    %c0_i32_1 = arith.constant 0 : i32
    return %arg1, %c0_i32, %c0_i32_0 : i32, i32, i32
  }
  func.func @transform_8(%arg0: i32, %arg1: i32) -> (i32, i32, i32) {
    %c0_i32 = arith.constant 0 : i32
    %c0_i32_0 = arith.constant 0 : i32
    %c0_i32_1 = arith.constant 0 : i32
    return %arg1, %c0_i32, %c0_i32_0 : i32, i32, i32
  }
  func.func @transform_9(%arg0: i32, %arg1: i32) -> (i32, i32, i32) {
    %c0_i32 = arith.constant 0 : i32
    %c0_i32_0 = arith.constant 0 : i32
    %c0_i32_1 = arith.constant 0 : i32
    return %arg1, %c0_i32, %c0_i32_0 : i32, i32, i32
  }
  func.func @transform_10(%arg0: i32, %arg1: i32) -> (i32, i32, i32) {
    %c0_i32 = arith.constant 0 : i32
    %c0_i32_0 = arith.constant 0 : i32
    %c0_i32_1 = arith.constant 0 : i32
    return %arg1, %c0_i32, %c0_i32_0 : i32, i32, i32
  }
  func.func @transform_11(%arg0: i32, %arg1: i32) -> (i32, i32, i32) {
    %c0_i32 = arith.constant 0 : i32
    %c0_i32_0 = arith.constant 0 : i32
    %c0_i32_1 = arith.constant 0 : i32
    return %arg1, %c0_i32, %c0_i32_0 : i32, i32, i32
  }
  func.func @transform_12(%arg0: i32, %arg1: i32) -> (i32, i32, i32) {
    %c0_i32 = arith.constant 0 : i32
    %c0_i32_0 = arith.constant 0 : i32
    %c0_i32_1 = arith.constant 0 : i32
    return %arg1, %c0_i32, %c0_i32_0 : i32, i32, i32
  }
  func.func @transform_13(%arg0: i32, %arg1: i32) -> (i32, i32) {
    %c0_i32 = arith.constant 0 : i32
    %c0_i32_0 = arith.constant 0 : i32
    %c0_i32_1 = arith.constant 0 : i32
    return %c0_i32, %c0_i32_0 : i32, i32
  }
  func.func @transform_14(%arg0: i32, %arg1: i32) -> (i32, i32) {
    %c0_i32 = arith.constant 0 : i32
    %c0_i32_0 = arith.constant 0 : i32
    %c0_i32_1 = arith.constant 0 : i32
    return %c0_i32, %c0_i32_0 : i32, i32
  }
  func.func @transform_15(%arg0: i32, %arg1: i32) -> (i32, i32, i32) {
    %c0_i32 = arith.constant 0 : i32
    %c0_i32_0 = arith.constant 0 : i32
    %c0_i32_1 = arith.constant 0 : i32
    return %arg0, %c0_i32, %c0_i32_0 : i32, i32, i32
  }
}

</mosaic_0001>

<llo_original>
// kernel: tpu_custom_call.1
$region0: #{tpu_custom_call.1}
  #allocation0 [shape = 'u32[]', space=smem, size = 0x4, offset = 0x4, fixed_abs, tag = 'smem constant byte address 0x4 - core index']
  #allocation1 [shape = 'u32[144,128]{1,0:T(1,128)}', space=vmem, size = 0x12000, scoped, tag = 'internal scratch']
  #allocation2 [shape = 'f32[2,8,32]{2,1,0:T(8,128)}', space=vmem, size = 0x2000, scoped, tag = 'scratch operand']
  %s0 = inlined_call_operand.hbm [shape: f32[2,8,32], index: 0, kind: input, shape index: {}]
  %s1 = inlined_call_operand.vmem [shape: bf16[2,32,96], index: 1, kind: input, shape index: {}]
  %s2 = inlined_call_operand.vmem [shape: f32[2,1,96], index: 2, kind: input, shape index: {}]
  %s3 = inlined_call_operand.vmem [shape: bf16[2,32,32], index: 3, kind: input, shape index: {}]
  %s4 = inlined_call_operand.hbm [shape: f32[2,1,32], index: 4, kind: input, shape index: {}]
  %s5 = inlined_call_operand.hbm [shape: f32[2,1,32], index: 5, kind: input, shape index: {}]
  %s6 = inlined_call_operand.hbm [shape: f32[2,1,32], index: 6, kind: input, shape index: {}]
  %s7 = inlined_call_operand.vmem [shape: bf16[2,32,64], index: 7, kind: input, shape index: {}]
  %s8 = inlined_call_operand.hbm [shape: f32[2,1,64], index: 8, kind: input, shape index: {}]
  %s9 = inlined_call_operand.vmem [shape: bf16[2,64,32], index: 9, kind: input, shape index: {}]
  %s10 = inlined_call_operand.vmem [shape: f32[2,1,32], index: 10, kind: input, shape index: {}]
  %s11 = inlined_call_operand.vmem [shape: f32[2,1,32], index: 11, kind: input, shape index: {}]
  %s12 = inlined_call_operand.vmem [shape: f32[2,1,32], index: 12, kind: input, shape index: {}]
  %s13 = inlined_call_operand.vmem [shape: f32[1,32], index: 13, kind: input, shape index: {}]
  %s14 = inlined_call_operand.vmem [shape: f32[1,32], index: 14, kind: input, shape index: {}]
  %s15 = inlined_call_operand.hbm [shape: f32[2,8,32], index: 15, kind: output, shape index: {}]
  %s16 = sld [smem:[#allocation0]]
  $region121: #{tpu_custom_call.1} parent=0
    _
  %s18 = ssub.s32 1, %s16
  %s19 = scalar_select 0, %s18, %s16
  $region1: #{tpu_custom_call.1} parent=0
    #allocation3 [shape = 'u8[8192]{0}', space=vmem, size = 0x2000, scoped, tag = 'input window, operand 0, single buffered']
    #allocation4 [shape = 's32[2]{0}', space=sflag, size = 0x8, scoped, tag = 'scoped memory for tpu_custom_call.1']
    #allocation5 [shape = 's32[2]{0}', space=sflag, size = 0x8, scoped, tag = 'scoped memory for tpu_custom_call.1']
    #allocation6 [shape = 'u8[1024]{0}', space=vmem, size = 0x400, scoped, tag = 'input window, operand 4']
    #allocation7 [shape = 's32[2]{0}', space=sflag, size = 0x8, scoped, tag = 'scoped memory for tpu_custom_call.1']
    #allocation8 [shape = 'u8[1024]{0}', space=vmem, size = 0x400, scoped, tag = 'input window, operand 5']
    #allocation9 [shape = 'u8[1024]{0}', space=vmem, size = 0x400, scoped, tag = 'input window, operand 6']
    #allocation10 [shape = 's32[2]{0}', space=sflag, size = 0x8, scoped, tag = 'scoped memory for tpu_custom_call.1']
    #allocation11 [shape = 'u8[1024]{0}', space=vmem, size = 0x400, scoped, tag = 'input window, operand 8']
    #allocation12 [shape = 'u8[8192]{0}', space=vmem, size = 0x2000, scoped, tag = 'output window, operand 0, single buffered']
    %20 = vsyncpa [#allocation4], 0
    %21 = vsyncpa [#allocation7], 0
    %s22 = scalar_lea.sflag [#allocation7], 1
    %23 = vsyncpa %s22, 0
    %24 = vsyncpa [#allocation10], 0
    %s25 = scalar_lea.sflag [#allocation10], 1
    %26 = vsyncpa %s25, 0
    %27 = vsyncpa [#allocation5], 0
    loop: start=0, step=1, limit=4
    $region2: #{tpu_custom_call.1} parent=1 // loop_pre_header
      _
    $region3: #{tpu_custom_call.1} parent=1 // loop_header
      %s29 = sphi 0, %s33
      %p30 = scmp.ge.s32.totalorder %s29, 4
      %s36 = sphi 0, %s48
      %s37 = sphi 0, %s44
      %s38 = sphi 0, %s36
      %s39 = sphi 0, %s37
      %s40 = sphi 0, %s38
      %s41 = sphi 0, %s39
      %s51 = sphi 0, %s53
      %s54 = sphi 0, %s51
      %s55 = sphi 0, %s54
      %s71 = sphi 0, %s55
      %s77 = sphi 0, %s79
      %s80 = sphi 0, %s77
      %s81 = sphi 0, %s80
      %s97 = sphi 0, %s81
      %s103 = sphi 0, %s105
      %s106 = sphi 0, %s103
      %s107 = sphi 0, %s106
      %s123 = sphi 0, %s107
      %s129 = sphi 0, %s131
      %s132 = sphi 0, %s129
      %s133 = sphi 0, %s132
      %s149 = sphi 0, %s133
      %s155 = sphi 0, %s157
      %s158 = sphi 0, %s155
      %s159 = sphi 0, %s158
      %s175 = sphi 0, %s159
      %s181 = sphi 0, %s183
      %s184 = sphi 0, %s181
      %s185 = sphi 0, %s184
      %s201 = sphi 0, %s185
      %s207 = sphi 0, %s209
      %s210 = sphi 0, %s207
      %s211 = sphi 0, %s210
      %s227 = sphi 0, %s211
      %s233 = sphi 0, %s235
      %s236 = sphi 0, %s233
      %s237 = sphi 0, %s236
      %s253 = sphi 0, %s237
      %s259 = sphi 0, %s261
      %s262 = sphi 0, %s259
      %s263 = sphi 0, %s262
      %s279 = sphi 0, %s263
      %s285 = sphi 0, %s287
      %s288 = sphi 0, %s285
      %s289 = sphi 0, %s288
      %s305 = sphi 0, %s289
      %s311 = sphi 0, %s313
      %s314 = sphi 0, %s311
      %s315 = sphi 0, %s314
      %s331 = sphi 0, %s315
      %s337 = sphi 0, %s339
      %s340 = sphi 0, %s337
      %s341 = sphi 0, %s340
      %s357 = sphi 0, %s341
      %s363 = sphi 0, %s365
      %s366 = sphi 0, %s363
      %s367 = sphi 0, %s366
      %s383 = sphi 0, %s367
      %s387 = sphi 0, %s387
      %s389 = sphi 0, %s387
      %s390 = sphi 0, %s389
      %s404 = sphi 0, %s390
      %s408 = sphi 0, %s408
      %s410 = sphi 0, %s408
      %s411 = sphi 0, %s410
      %s425 = sphi 0, %s411
      %s431 = sphi 0, %s433
      %s434 = sphi 0, %s431
      %s435 = sphi 0, %s434
      %s451 = sphi 0, %s435
    $region4: #{tpu_custom_call.1} parent=1 // loop_header_branch
      %32 = sbr.rel (%p30) target = $region8
    $region5: #{tpu_custom_call.1} parent=1 // loop_body
      %s34 = ssub.s32 %s29, 1
      %s35 = ssub.s32 %s29, 2
      %s42 = sadd.s32 1, %s37
      %p43 = scmp.ge.s32.totalorder %s42, 2
      %s44 = scalar_select %p43, 0, %s42
      %s45 = sadd.s32 1, %s36
      %s46 = scalar_select %p43, %s45, %s36
      %p47 = scmp.ge.s32.totalorder %s46, 1
      %s48 = scalar_select %p47, 0, %s46
      %s49 = ssub.s32 %s36, %s48
      %p50 = scmp.eq.s32.totalorder %s49, 0
      %s52 = sadd.s32 %s51, 1
      %s53 = scalar_select %p50, %s51, %s52
      %p56 = pneg %p50
      %p57 = scmp.eq.s32.totalorder %s29, 1
      %p58 = por %p56, %p57
      %p59 = scmp.ne.s32.totalorder %s51, %s54
      %p60 = scmp.eq.s32.totalorder %s29, 0
      %p61 = por %p59, %p60
      %p62 = scmp.ne.s32.totalorder %s51, %s54
      %p63 = scmp.eq.s32.totalorder %s34, 1
      %p64 = por %p62, %p63
      %p65 = scmp.ne.s32.totalorder %s54, %s55
      %p66 = scmp.eq.s32.totalorder %s34, 0
      %p67 = por %p65, %p66
      %p68 = scmp.ne.s32.totalorder %s54, %s55
      %p69 = scmp.eq.s32.totalorder %s35, 1
      %p70 = por %p68, %p69
      %p72 = scmp.ne.s32.totalorder %s55, %s71
      %p73 = scmp.eq.s32.totalorder %s35, 0
      %p74 = por %p72, %p73
      %s75 = ssub.s32 %s37, %s44
      %p76 = scmp.eq.s32.totalorder %s75, 0
      %s78 = sadd.s32 %s77, 1
      %s79 = scalar_select %p76, %s77, %s78
      %p82 = pneg %p76
      %p83 = scmp.eq.s32.totalorder %s29, 1
      %p84 = por %p82, %p83
      %p85 = scmp.ne.s32.totalorder %s77, %s80
      %p86 = scmp.eq.s32.totalorder %s29, 0
      %p87 = por %p85, %p86
      %p88 = scmp.ne.s32.totalorder %s77, %s80
      %p89 = scmp.eq.s32.totalorder %s34, 1
      %p90 = por %p88, %p89
      %p91 = scmp.ne.s32.totalorder %s80, %s81
      %p92 = scmp.eq.s32.totalorder %s34, 0
      %p93 = por %p91, %p92
      %p94 = scmp.ne.s32.totalorder %s80, %s81
      %p95 = scmp.eq.s32.totalorder %s35, 1
      %p96 = por %p94, %p95
      %p98 = scmp.ne.s32.totalorder %s81, %s97
      %p99 = scmp.eq.s32.totalorder %s35, 0
      %p100 = por %p98, %p99
      %s101 = ssub.s32 %s37, %s44
      %p102 = scmp.eq.s32.totalorder %s101, 0
      %s104 = sadd.s32 %s103, 1
      %s105 = scalar_select %p102, %s103, %s104
      %p108 = pneg %p102
      %p109 = scmp.eq.s32.totalorder %s29, 1
      %p110 = por %p108, %p109
      %p111 = scmp.ne.s32.totalorder %s103, %s106
      %p112 = scmp.eq.s32.totalorder %s29, 0
      %p113 = por %p111, %p112
      %p114 = scmp.ne.s32.totalorder %s103, %s106
      %p115 = scmp.eq.s32.totalorder %s34, 1
      %p116 = por %p114, %p115
      %p117 = scmp.ne.s32.totalorder %s106, %s107
      %p118 = scmp.eq.s32.totalorder %s34, 0
      %p119 = por %p117, %p118
      %p120 = scmp.ne.s32.totalorder %s106, %s107
      %p121 = scmp.eq.s32.totalorder %s35, 1
      %p122 = por %p120, %p121
      %p124 = scmp.ne.s32.totalorder %s107, %s123
      %p125 = scmp.eq.s32.totalorder %s35, 0
      %p126 = por %p124, %p125
      %s127 = ssub.s32 %s37, %s44
      %p128 = scmp.eq.s32.totalorder %s127, 0
      %s130 = sadd.s32 %s129, 1
      %s131 = scalar_select %p128, %s129, %s130
      %p134 = pneg %p128
      %p135 = scmp.eq.s32.totalorder %s29, 1
      %p136 = por %p134, %p135
      %p137 = scmp.ne.s32.totalorder %s129, %s132
      %p138 = scmp.eq.s32.totalorder %s29, 0
      %p139 = por %p137, %p138
      %p140 = scmp.ne.s32.totalorder %s129, %s132
      %p141 = scmp.eq.s32.totalorder %s34, 1
      %p142 = por %p140, %p141
      %p143 = scmp.ne.s32.totalorder %s132, %s133
      %p144 = scmp.eq.s32.totalorder %s34, 0
      %p145 = por %p143, %p144
      %p146 = scmp.ne.s32.totalorder %s132, %s133
      %p147 = scmp.eq.s32.totalorder %s35, 1
      %p148 = por %p146, %p147
      %p150 = scmp.ne.s32.totalorder %s133, %s149
      %p151 = scmp.eq.s32.totalorder %s35, 0
      %p152 = por %p150, %p151
      %s153 = ssub.s32 %s37, %s44
      %p154 = scmp.eq.s32.totalorder %s153, 0
      %s156 = sadd.s32 %s155, 1
      %s157 = scalar_select %p154, %s155, %s156
      %p160 = pneg %p154
      %p161 = scmp.eq.s32.totalorder %s29, 1
      %p162 = por %p160, %p161
      %p163 = scmp.ne.s32.totalorder %s155, %s158
      %p164 = scmp.eq.s32.totalorder %s29, 0
      %p165 = por %p163, %p164
      %p166 = scmp.ne.s32.totalorder %s155, %s158
      %p167 = scmp.eq.s32.totalorder %s34, 1
      %p168 = por %p166, %p167
      %p169 = scmp.ne.s32.totalorder %s158, %s159
      %p170 = scmp.eq.s32.totalorder %s34, 0
      %p171 = por %p169, %p170
      %p172 = scmp.ne.s32.totalorder %s158, %s159
      %p173 = scmp.eq.s32.totalorder %s35, 1
      %p174 = por %p172, %p173
      %p176 = scmp.ne.s32.totalorder %s159, %s175
      %p177 = scmp.eq.s32.totalorder %s35, 0
      %p178 = por %p176, %p177
      %s179 = ssub.s32 %s37, %s44
      %p180 = scmp.eq.s32.totalorder %s179, 0
      %s182 = sadd.s32 %s181, 1
      %s183 = scalar_select %p180, %s181, %s182
      %p186 = pneg %p180
      %p187 = scmp.eq.s32.totalorder %s29, 1
      %p188 = por %p186, %p187
      %p189 = scmp.ne.s32.totalorder %s181, %s184
      %p190 = scmp.eq.s32.totalorder %s29, 0
      %p191 = por %p189, %p190
      %p192 = scmp.ne.s32.totalorder %s181, %s184
      %p193 = scmp.eq.s32.totalorder %s34, 1
      %p194 = por %p192, %p193
      %p195 = scmp.ne.s32.totalorder %s184, %s185
      %p196 = scmp.eq.s32.totalorder %s34, 0
      %p197 = por %p195, %p196
      %p198 = scmp.ne.s32.totalorder %s184, %s185
      %p199 = scmp.eq.s32.totalorder %s35, 1
      %p200 = por %p198, %p199
      %p202 = scmp.ne.s32.totalorder %s185, %s201
      %p203 = scmp.eq.s32.totalorder %s35, 0
      %p204 = por %p202, %p203
      %s205 = ssub.s32 %s37, %s44
      %p206 = scmp.eq.s32.totalorder %s205, 0
      %s208 = sadd.s32 %s207, 1
      %s209 = scalar_select %p206, %s207, %s208
      %p212 = pneg %p206
      %p213 = scmp.eq.s32.totalorder %s29, 1
      %p214 = por %p212, %p213
      %p215 = scmp.ne.s32.totalorder %s207, %s210
      %p216 = scmp.eq.s32.totalorder %s29, 0
      %p217 = por %p215, %p216
      %p218 = scmp.ne.s32.totalorder %s207, %s210
      %p219 = scmp.eq.s32.totalorder %s34, 1
      %p220 = por %p218, %p219
      %p221 = scmp.ne.s32.totalorder %s210, %s211
      %p222 = scmp.eq.s32.totalorder %s34, 0
      %p223 = por %p221, %p222
      %p224 = scmp.ne.s32.totalorder %s210, %s211
      %p225 = scmp.eq.s32.totalorder %s35, 1
      %p226 = por %p224, %p225
      %p228 = scmp.ne.s32.totalorder %s211, %s227
      %p229 = scmp.eq.s32.totalorder %s35, 0
      %p230 = por %p228, %p229
      %s231 = ssub.s32 %s37, %s44
      %p232 = scmp.eq.s32.totalorder %s231, 0
      %s234 = sadd.s32 %s233, 1
      %s235 = scalar_select %p232, %s233, %s234
      %p238 = pneg %p232
      %p239 = scmp.eq.s32.totalorder %s29, 1
      %p240 = por %p238, %p239
      %p241 = scmp.ne.s32.totalorder %s233, %s236
      %p242 = scmp.eq.s32.totalorder %s29, 0
      %p243 = por %p241, %p242
      %p244 = scmp.ne.s32.totalorder %s233, %s236
      %p245 = scmp.eq.s32.totalorder %s34, 1
      %p246 = por %p244, %p245
      %p247 = scmp.ne.s32.totalorder %s236, %s237
      %p248 = scmp.eq.s32.totalorder %s34, 0
      %p249 = por %p247, %p248
      %p250 = scmp.ne.s32.totalorder %s236, %s237
      %p251 = scmp.eq.s32.totalorder %s35, 1
      %p252 = por %p250, %p251
      %p254 = scmp.ne.s32.totalorder %s237, %s253
      %p255 = scmp.eq.s32.totalorder %s35, 0
      %p256 = por %p254, %p255
      %s257 = ssub.s32 %s37, %s44
      %p258 = scmp.eq.s32.totalorder %s257, 0
      %s260 = sadd.s32 %s259, 1
      %s261 = scalar_select %p258, %s259, %s260
      %p264 = pneg %p258
      %p265 = scmp.eq.s32.totalorder %s29, 1
      %p266 = por %p264, %p265
      %p267 = scmp.ne.s32.totalorder %s259, %s262
      %p268 = scmp.eq.s32.totalorder %s29, 0
      %p269 = por %p267, %p268
      %p270 = scmp.ne.s32.totalorder %s259, %s262
      %p271 = scmp.eq.s32.totalorder %s34, 1
      %p272 = por %p270, %p271
      %p273 = scmp.ne.s32.totalorder %s262, %s263
      %p274 = scmp.eq.s32.totalorder %s34, 0
      %p275 = por %p273, %p274
      %p276 = scmp.ne.s32.totalorder %s262, %s263
      %p277 = scmp.eq.s32.totalorder %s35, 1
      %p278 = por %p276, %p277
      %p280 = scmp.ne.s32.totalorder %s263, %s279
      %p281 = scmp.eq.s32.totalorder %s35, 0
      %p282 = por %p280, %p281
      %s283 = ssub.s32 %s37, %s44
      %p284 = scmp.eq.s32.totalorder %s283, 0
      %s286 = sadd.s32 %s285, 1
      %s287 = scalar_select %p284, %s285, %s286
      %p290 = pneg %p284
      %p291 = scmp.eq.s32.totalorder %s29, 1
      %p292 = por %p290, %p291
      %p293 = scmp.ne.s32.totalorder %s285, %s288
      %p294 = scmp.eq.s32.totalorder %s29, 0
      %p295 = por %p293, %p294
      %p296 = scmp.ne.s32.totalorder %s285, %s288
      %p297 = scmp.eq.s32.totalorder %s34, 1
      %p298 = por %p296, %p297
      %p299 = scmp.ne.s32.totalorder %s288, %s289
      %p300 = scmp.eq.s32.totalorder %s34, 0
      %p301 = por %p299, %p300
      %p302 = scmp.ne.s32.totalorder %s288, %s289
      %p303 = scmp.eq.s32.totalorder %s35, 1
      %p304 = por %p302, %p303
      %p306 = scmp.ne.s32.totalorder %s289, %s305
      %p307 = scmp.eq.s32.totalorder %s35, 0
      %p308 = por %p306, %p307
      %s309 = ssub.s32 %s37, %s44
      %p310 = scmp.eq.s32.totalorder %s309, 0
      %s312 = sadd.s32 %s311, 1
      %s313 = scalar_select %p310, %s311, %s312
      %p316 = pneg %p310
      %p317 = scmp.eq.s32.totalorder %s29, 1
      %p318 = por %p316, %p317
      %p319 = scmp.ne.s32.totalorder %s311, %s314
      %p320 = scmp.eq.s32.totalorder %s29, 0
      %p321 = por %p319, %p320
      %p322 = scmp.ne.s32.totalorder %s311, %s314
      %p323 = scmp.eq.s32.totalorder %s34, 1
      %p324 = por %p322, %p323
      %p325 = scmp.ne.s32.totalorder %s314, %s315
      %p326 = scmp.eq.s32.totalorder %s34, 0
      %p327 = por %p325, %p326
      %p328 = scmp.ne.s32.totalorder %s314, %s315
      %p329 = scmp.eq.s32.totalorder %s35, 1
      %p330 = por %p328, %p329
      %p332 = scmp.ne.s32.totalorder %s315, %s331
      %p333 = scmp.eq.s32.totalorder %s35, 0
      %p334 = por %p332, %p333
      %s335 = ssub.s32 %s37, %s44
      %p336 = scmp.eq.s32.totalorder %s335, 0
      %s338 = sadd.s32 %s337, 1
      %s339 = scalar_select %p336, %s337, %s338
      %p342 = pneg %p336
      %p343 = scmp.eq.s32.totalorder %s29, 1
      %p344 = por %p342, %p343
      %p345 = scmp.ne.s32.totalorder %s337, %s340
      %p346 = scmp.eq.s32.totalorder %s29, 0
      %p347 = por %p345, %p346
      %p348 = scmp.ne.s32.totalorder %s337, %s340
      %p349 = scmp.eq.s32.totalorder %s34, 1
      %p350 = por %p348, %p349
      %p351 = scmp.ne.s32.totalorder %s340, %s341
      %p352 = scmp.eq.s32.totalorder %s34, 0
      %p353 = por %p351, %p352
      %p354 = scmp.ne.s32.totalorder %s340, %s341
      %p355 = scmp.eq.s32.totalorder %s35, 1
      %p356 = por %p354, %p355
      %p358 = scmp.ne.s32.totalorder %s341, %s357
      %p359 = scmp.eq.s32.totalorder %s35, 0
      %p360 = por %p358, %p359
      %s361 = ssub.s32 %s37, %s44
      %p362 = scmp.eq.s32.totalorder %s361, 0
      %s364 = sadd.s32 %s363, 1
      %s365 = scalar_select %p362, %s363, %s364
      %p368 = pneg %p362
      %p369 = scmp.eq.s32.totalorder %s29, 1
      %p370 = por %p368, %p369
      %p371 = scmp.ne.s32.totalorder %s363, %s366
      %p372 = scmp.eq.s32.totalorder %s29, 0
      %p373 = por %p371, %p372
      %p374 = scmp.ne.s32.totalorder %s363, %s366
      %p375 = scmp.eq.s32.totalorder %s34, 1
      %p376 = por %p374, %p375
      %p377 = scmp.ne.s32.totalorder %s366, %s367
      %p378 = scmp.eq.s32.totalorder %s34, 0
      %p379 = por %p377, %p378
      %p380 = scmp.ne.s32.totalorder %s366, %s367
      %p381 = scmp.eq.s32.totalorder %s35, 1
      %p382 = por %p380, %p381
      %p384 = scmp.ne.s32.totalorder %s367, %s383
      %p385 = scmp.eq.s32.totalorder %s35, 0
      %p386 = por %p384, %p385
      %s388 = sadd.s32 %s387, 1
      %p391 = scmp.eq.s32.totalorder %s29, 1
      %p392 = scmp.ne.s32.totalorder %s387, %s389
      %p393 = scmp.eq.s32.totalorder %s29, 0
      %p394 = por %p392, %p393
      %p395 = scmp.ne.s32.totalorder %s387, %s389
      %p396 = scmp.eq.s32.totalorder %s34, 1
      %p397 = por %p395, %p396
      %p398 = scmp.ne.s32.totalorder %s389, %s390
      %p399 = scmp.eq.s32.totalorder %s34, 0
      %p400 = por %p398, %p399
      %p401 = scmp.ne.s32.totalorder %s389, %s390
      %p402 = scmp.eq.s32.totalorder %s35, 1
      %p403 = por %p401, %p402
      %p405 = scmp.ne.s32.totalorder %s390, %s404
      %p406 = scmp.eq.s32.totalorder %s35, 0
      %p407 = por %p405, %p406
      %s409 = sadd.s32 %s408, 1
      %p412 = scmp.eq.s32.totalorder %s29, 1
      %p413 = scmp.ne.s32.totalorder %s408, %s410
      %p414 = scmp.eq.s32.totalorder %s29, 0
      %p415 = por %p413, %p414
      %p416 = scmp.ne.s32.totalorder %s408, %s410
      %p417 = scmp.eq.s32.totalorder %s34, 1
      %p418 = por %p416, %p417
      %p419 = scmp.ne.s32.totalorder %s410, %s411
      %p420 = scmp.eq.s32.totalorder %s34, 0
      %p421 = por %p419, %p420
      %p422 = scmp.ne.s32.totalorder %s410, %s411
      %p423 = scmp.eq.s32.totalorder %s35, 1
      %p424 = por %p422, %p423
      %p426 = scmp.ne.s32.totalorder %s411, %s425
      %p427 = scmp.eq.s32.totalorder %s35, 0
      %p428 = por %p426, %p427
      %s429 = ssub.s32 %s36, %s48
      %p430 = scmp.eq.s32.totalorder %s429, 0
      %s432 = sadd.s32 %s431, 1
      %s433 = scalar_select %p430, %s431, %s432
      %p436 = pneg %p430
      %p437 = scmp.eq.s32.totalorder %s29, 1
      %p438 = por %p436, %p437
      %p439 = scmp.ne.s32.totalorder %s431, %s434
      %p440 = scmp.eq.s32.totalorder %s29, 0
      %p441 = por %p439, %p440
      %p442 = scmp.ne.s32.totalorder %s431, %s434
      %p443 = scmp.eq.s32.totalorder %s34, 1
      %p444 = por %p442, %p443
      %p445 = scmp.ne.s32.totalorder %s434, %s435
      %p446 = scmp.eq.s32.totalorder %s34, 0
      %p447 = por %p445, %p446
      %p448 = scmp.ne.s32.totalorder %s434, %s435
      %p449 = scmp.eq.s32.totalorder %s35, 1
      %p450 = por %p448, %p449
      %p452 = scmp.ne.s32.totalorder %s435, %s451
      %p453 = scmp.eq.s32.totalorder %s35, 0
      %p454 = por %p452, %p453
      %p455 = scmp.le.s32.totalorder 1, %s29
      %p456 = scmp.lt.s32.totalorder %s29, 3
      %p457 = pnand %p455, %p456
      %p458 = pneg %p457
      // Predicated region
      $region9: #{tpu_custom_call.1} parent=5 // pred_check
        _
      $region10: #{tpu_custom_call.1} parent=5 // pred_check_branch
        %460 = sbr.rel (%p457) target = $region12
      $region11: #{tpu_custom_call.1} parent=5 // pred_region
        %s461 = ssub.s32 %s29, 1
        // Predicated region
        $region13: #{tpu_custom_call.1} parent=11 // pred_check
          %p462 = pneg %p67
        $region14: #{tpu_custom_call.1} parent=11 // pred_check_branch
          %464 = sbr.rel (%p462) target = $region16
        $region15: #{tpu_custom_call.1} parent=11 // pred_region
          %s465 = smul.u32 2, %s38
          %s467 = ssub.s32 256, 256
          %468 = vsyncadd [#allocation4], %s467
          %s469 = smul.addr %s465, 128
          %s470 = scalar_lea.hbm %s0, %s469
          %s471 = sshll.u32 [#allocation3], 4
          %s472 = int_to_ptr.vmem [resolvable:$true] %s471
          %477 = dma.hbm_to_vmem [thread:$0]  %s470, 256, %s472, [#allocation4], 128, 128, 8
        $region16: #{tpu_custom_call.1} parent=11 // pred_fallthru
          _
        // Predicated region
        $region17: #{tpu_custom_call.1} parent=11 // pred_check
          %p478 = pneg %p400
        $region18: #{tpu_custom_call.1} parent=11 // pred_check_branch
          %480 = sbr.rel (%p478) target = $region20
        $region19: #{tpu_custom_call.1} parent=11 // pred_region
          _
        $region20: #{tpu_custom_call.1} parent=11 // pred_fallthru
          _
        // Predicated region
        $region21: #{tpu_custom_call.1} parent=11 // pred_check
          %p481 = pneg %p421
        $region22: #{tpu_custom_call.1} parent=11 // pred_check_branch
          %483 = sbr.rel (%p481) target = $region24
        $region23: #{tpu_custom_call.1} parent=11 // pred_region
          _
        $region24: #{tpu_custom_call.1} parent=11 // pred_fallthru
          _
      $region12: #{tpu_custom_call.1} parent=5 // pred_fallthru
        _
      %p484 = scmp.lt.s32.totalorder %s29, 2
      // Predicated region
      $region25: #{tpu_custom_call.1} parent=5 // pred_check
        %p485 = pneg %p484
      $region26: #{tpu_custom_call.1} parent=5 // pred_check_branch
        %487 = sbr.rel (%p485) target = $region28
      $region27: #{tpu_custom_call.1} parent=5 // pred_region
        // Predicated region
        $region29: #{tpu_custom_call.1} parent=27 // pred_check
          %p488 = pneg %p87
        $region30: #{tpu_custom_call.1} parent=27 // pred_check_branch
          %490 = sbr.rel (%p488) target = $region32
        $region31: #{tpu_custom_call.1} parent=27 // pred_region
          %p491 = scmp.lt.s32.totalorder %s37, 1
          %s492 = scalar_select %p491, %s37, 1
          %s493 = smul.addr %s492, 4
          %s494 = smul.addr %s493, 4
          %s495 = scalar_lea.vmem %s1, %s494
        $region32: #{tpu_custom_call.1} parent=27 // pred_fallthru
          _
        // Predicated region
        $region33: #{tpu_custom_call.1} parent=27 // pred_check
          %p496 = pneg %p113
        $region34: #{tpu_custom_call.1} parent=27 // pred_check_branch
          %498 = sbr.rel (%p496) target = $region36
        $region35: #{tpu_custom_call.1} parent=27 // pred_region
          %p499 = scmp.lt.s32.totalorder %s37, 1
          %s500 = scalar_select %p499, %s37, 1
          %s501 = scalar_lea.vmem %s2, %s500
        $region36: #{tpu_custom_call.1} parent=27 // pred_fallthru
          _
        // Predicated region
        $region37: #{tpu_custom_call.1} parent=27 // pred_check
          %p502 = pneg %p139
        $region38: #{tpu_custom_call.1} parent=27 // pred_check_branch
          %504 = sbr.rel (%p502) target = $region40
        $region39: #{tpu_custom_call.1} parent=27 // pred_region
          %p505 = scmp.lt.s32.totalorder %s37, 1
          %s506 = scalar_select %p505, %s37, 1
          %s507 = smul.addr %s506, 4
          %s508 = smul.addr %s507, 4
          %s509 = scalar_lea.vmem %s3, %s508
        $region40: #{tpu_custom_call.1} parent=27 // pred_fallthru
          _
        // Predicated region
        $region41: #{tpu_custom_call.1} parent=27 // pred_check
          %p510 = pneg %p165
        $region42: #{tpu_custom_call.1} parent=27 // pred_check_branch
          %512 = sbr.rel (%p510) target = $region44
        $region43: #{tpu_custom_call.1} parent=27 // pred_region
          %s513 = sand.u32 %s29, 1
          %s514 = scalar_lea.sflag [#allocation7], %s513
          %s515 = sand.u32 %s155, 1
          %s516 = scalar_lea.vmem [#allocation6], %s515
          %s518 = ssub.s32 16, 16
          %519 = vsyncadd %s514, %s518
          %s520 = smul.addr %s37, 16
          %s521 = scalar_lea.hbm %s4, %s520
          %s523 = sshll.u32 %s516, 4
          %s524 = int_to_ptr.vmem [resolvable:$true] %s523
          %526 = dma.hbm_to_vmem [thread:$0]  %s521, 16, %s524, %s514
        $region44: #{tpu_custom_call.1} parent=27 // pred_fallthru
          _
        // Predicated region
        $region45: #{tpu_custom_call.1} parent=27 // pred_check
          %p527 = pneg %p191
        $region46: #{tpu_custom_call.1} parent=27 // pred_check_branch
          %529 = sbr.rel (%p527) target = $region48
        $region47: #{tpu_custom_call.1} parent=27 // pred_region
          %s530 = sand.u32 %s29, 1
          %s531 = scalar_lea.sflag [#allocation7], %s530
          %s532 = sand.u32 %s181, 1
          %s533 = scalar_lea.vmem [#allocation8], %s532
          %s535 = ssub.s32 16, 16
          %536 = vsyncadd %s531, %s535
          %s537 = smul.addr %s37, 16
          %s538 = scalar_lea.hbm %s5, %s537
          %s540 = sshll.u32 %s533, 4
          %s541 = int_to_ptr.vmem [resolvable:$true] %s540
          %543 = dma.hbm_to_vmem [thread:$0]  %s538, 16, %s541, %s531
        $region48: #{tpu_custom_call.1} parent=27 // pred_fallthru
          _
        // Predicated region
        $region49: #{tpu_custom_call.1} parent=27 // pred_check
          %p544 = pneg %p217
        $region50: #{tpu_custom_call.1} parent=27 // pred_check_branch
          %546 = sbr.rel (%p544) target = $region52
        $region51: #{tpu_custom_call.1} parent=27 // pred_region
          %s547 = sand.u32 %s29, 1
          %s548 = scalar_lea.sflag [#allocation10], %s547
          %s549 = sand.u32 %s207, 1
          %s550 = scalar_lea.vmem [#allocation9], %s549
          %s552 = ssub.s32 16, 16
          %553 = vsyncadd %s548, %s552
          %s554 = smul.addr %s37, 16
          %s555 = scalar_lea.hbm %s6, %s554
          %s557 = sshll.u32 %s550, 4
          %s558 = int_to_ptr.vmem [resolvable:$true] %s557
          %560 = dma.hbm_to_vmem [thread:$0]  %s555, 16, %s558, %s548
        $region52: #{tpu_custom_call.1} parent=27 // pred_fallthru
          _
        // Predicated region
        $region53: #{tpu_custom_call.1} parent=27 // pred_check
          %p561 = pneg %p243
        $region54: #{tpu_custom_call.1} parent=27 // pred_check_branch
          %563 = sbr.rel (%p561) target = $region56
        $region55: #{tpu_custom_call.1} parent=27 // pred_region
          %p564 = scmp.lt.s32.totalorder %s37, 1
          %s565 = scalar_select %p564, %s37, 1
          %s566 = smul.addr %s565, 4
          %s567 = smul.addr %s566, 4
          %s568 = scalar_lea.vmem %s7, %s567
        $region56: #{tpu_custom_call.1} parent=27 // pred_fallthru
          _
        // Predicated region
        $region57: #{tpu_custom_call.1} parent=27 // pred_check
          %p569 = pneg %p269
        $region58: #{tpu_custom_call.1} parent=27 // pred_check_branch
          %571 = sbr.rel (%p569) target = $region60
        $region59: #{tpu_custom_call.1} parent=27 // pred_region
          %s572 = sand.u32 %s29, 1
          %s573 = scalar_lea.sflag [#allocation10], %s572
          %s574 = sand.u32 %s259, 1
          %s575 = scalar_lea.vmem [#allocation11], %s574
          %s577 = ssub.s32 16, 16
          %578 = vsyncadd %s573, %s577
          %s579 = smul.addr %s37, 16
          %s580 = scalar_lea.hbm %s8, %s579
          %s582 = sshll.u32 %s575, 4
          %s583 = int_to_ptr.vmem [resolvable:$true] %s582
          %585 = dma.hbm_to_vmem [thread:$0]  %s580, 16, %s583, %s573
        $region60: #{tpu_custom_call.1} parent=27 // pred_fallthru
          _
        // Predicated region
        $region61: #{tpu_custom_call.1} parent=27 // pred_check
          %p586 = pneg %p295
        $region62: #{tpu_custom_call.1} parent=27 // pred_check_branch
          %588 = sbr.rel (%p586) target = $region64
        $region63: #{tpu_custom_call.1} parent=27 // pred_region
          %p589 = scmp.lt.s32.totalorder %s37, 1
          %s590 = scalar_select %p589, %s37, 1
          %s591 = smul.addr %s590, 8
          %s592 = smul.addr %s591, 4
          %s593 = scalar_lea.vmem %s9, %s592
        $region64: #{tpu_custom_call.1} parent=27 // pred_fallthru
          _
        // Predicated region
        $region65: #{tpu_custom_call.1} parent=27 // pred_check
          %p594 = pneg %p321
        $region66: #{tpu_custom_call.1} parent=27 // pred_check_branch
          %596 = sbr.rel (%p594) target = $region68
        $region67: #{tpu_custom_call.1} parent=27 // pred_region
          %p597 = scmp.lt.s32.totalorder %s37, 1
          %s598 = scalar_select %p597, %s37, 1
          %s599 = scalar_lea.vmem %s10, %s598
        $region68: #{tpu_custom_call.1} parent=27 // pred_fallthru
          _
        // Predicated region
        $region69: #{tpu_custom_call.1} parent=27 // pred_check
          %p600 = pneg %p347
        $region70: #{tpu_custom_call.1} parent=27 // pred_check_branch
          %602 = sbr.rel (%p600) target = $region72
        $region71: #{tpu_custom_call.1} parent=27 // pred_region
          %p603 = scmp.lt.s32.totalorder %s37, 1
          %s604 = scalar_select %p603, %s37, 1
          %s605 = scalar_lea.vmem %s11, %s604
        $region72: #{tpu_custom_call.1} parent=27 // pred_fallthru
          _
        // Predicated region
        $region73: #{tpu_custom_call.1} parent=27 // pred_check
          %p606 = pneg %p373
        $region74: #{tpu_custom_call.1} parent=27 // pred_check_branch
          %608 = sbr.rel (%p606) target = $region76
        $region75: #{tpu_custom_call.1} parent=27 // pred_region
          %p609 = scmp.lt.s32.totalorder %s37, 1
          %s610 = scalar_select %p609, %s37, 1
          %s611 = scalar_lea.vmem %s12, %s610
        $region76: #{tpu_custom_call.1} parent=27 // pred_fallthru
          _
      $region28: #{tpu_custom_call.1} parent=5 // pred_fallthru
        _
      %p612 = scmp.le.s32.totalorder 1, %s29
      %p613 = scmp.lt.s32.totalorder %s29, 3
      %p614 = pnand %p612, %p613
      %p615 = pneg %p614
      // Predicated region
      $region77: #{tpu_custom_call.1} parent=5 // pred_check
        _
      $region78: #{tpu_custom_call.1} parent=5 // pred_check_branch
        %617 = sbr.rel (%p614) target = $region80
      $region79: #{tpu_custom_call.1} parent=5 // pred_region
        %s618 = ssub.s32 %s29, 1
        // Predicated region
        $region81: #{tpu_custom_call.1} parent=79 // pred_check
          %p619 = pneg %p67
        $region82: #{tpu_custom_call.1} parent=79 // pred_check_branch
          %621 = sbr.rel (%p619) target = $region84
        $region83: #{tpu_custom_call.1} parent=79 // pred_region
          %622 = dma.done [#allocation4], 256
        $region84: #{tpu_custom_call.1} parent=79 // pred_fallthru
          _
        %s623 = sand.u32 %s34, 1
        %s624 = scalar_lea.sflag [#allocation7], %s623
        %s625 = sand.u32 %s158, 1
        %s626 = scalar_lea.vmem [#allocation6], %s625
        // Predicated region
        $region85: #{tpu_custom_call.1} parent=79 // pred_check
          %p627 = pneg %p171
        $region86: #{tpu_custom_call.1} parent=79 // pred_check_branch
          %629 = sbr.rel (%p627) target = $region88
        $region87: #{tpu_custom_call.1} parent=79 // pred_region
          %630 = dma.done %s624, 16
        $region88: #{tpu_custom_call.1} parent=79 // pred_fallthru
          _
        %s631 = sand.u32 %s34, 1
        %s632 = scalar_lea.sflag [#allocation7], %s631
        %s633 = sand.u32 %s184, 1
        %s634 = scalar_lea.vmem [#allocation8], %s633
        // Predicated region
        $region89: #{tpu_custom_call.1} parent=79 // pred_check
          %p635 = pneg %p197
        $region90: #{tpu_custom_call.1} parent=79 // pred_check_branch
          %637 = sbr.rel (%p635) target = $region92
        $region91: #{tpu_custom_call.1} parent=79 // pred_region
          %638 = dma.done %s632, 16
        $region92: #{tpu_custom_call.1} parent=79 // pred_fallthru
          _
        %s639 = sand.u32 %s34, 1
        %s640 = scalar_lea.sflag [#allocation10], %s639
        %s641 = sand.u32 %s210, 1
        %s642 = scalar_lea.vmem [#allocation9], %s641
        // Predicated region
        $region93: #{tpu_custom_call.1} parent=79 // pred_check
          %p643 = pneg %p223
        $region94: #{tpu_custom_call.1} parent=79 // pred_check_branch
          %645 = sbr.rel (%p643) target = $region96
        $region95: #{tpu_custom_call.1} parent=79 // pred_region
          %646 = dma.done %s640, 16
        $region96: #{tpu_custom_call.1} parent=79 // pred_fallthru
          _
        %s647 = sand.u32 %s34, 1
        %s648 = scalar_lea.sflag [#allocation10], %s647
        %s649 = sand.u32 %s262, 1
        %s650 = scalar_lea.vmem [#allocation11], %s649
        // Predicated region
        $region97: #{tpu_custom_call.1} parent=79 // pred_check
          %p651 = pneg %p275
        $region98: #{tpu_custom_call.1} parent=79 // pred_check_branch
          %653 = sbr.rel (%p651) target = $region100
        $region99: #{tpu_custom_call.1} parent=79 // pred_region
          %654 = dma.done %s648, 16
        $region100: #{tpu_custom_call.1} parent=79 // pred_fallthru
          _
        %p655 = pneg %p67
        %p656 = pneg %p64
        %p657 = scmp.lt.s32.totalorder %s39, 1
        %s658 = scalar_select %p657, %s39, 1
        %s659 = smul.addr %s658, 4
        %s660 = smul.addr %s659, 4
        %s661 = scalar_lea.vmem %s1, %s660
        %p662 = pneg %p93
        %p663 = pneg %p90
        %p664 = scmp.lt.s32.totalorder %s39, 1
        %s665 = scalar_select %p664, %s39, 1
        %s666 = scalar_lea.vmem %s2, %s665
        %p667 = pneg %p119
        %p668 = pneg %p116
        %p669 = scmp.lt.s32.totalorder %s39, 1
        %s670 = scalar_select %p669, %s39, 1
        %s671 = smul.addr %s670, 4
        %s672 = smul.addr %s671, 4
        %s673 = scalar_lea.vmem %s3, %s672
        %p674 = pneg %p145
        %p675 = pneg %p142
        %s676 = sand.u32 %s34, 1
        %s677 = scalar_lea.sflag [#allocation7], %s676
        %s678 = sand.u32 %s158, 1
        %s679 = scalar_lea.vmem [#allocation6], %s678
        %p680 = pneg %p171
        %p681 = pneg %p168
        %s682 = sand.u32 %s34, 1
        %s683 = scalar_lea.sflag [#allocation7], %s682
        %s684 = sand.u32 %s184, 1
        %s685 = scalar_lea.vmem [#allocation8], %s684
        %p686 = pneg %p197
        %p687 = pneg %p194
        %s688 = sand.u32 %s34, 1
        %s689 = scalar_lea.sflag [#allocation10], %s688
        %s690 = sand.u32 %s210, 1
        %s691 = scalar_lea.vmem [#allocation9], %s690
        %p692 = pneg %p223
        %p693 = pneg %p220
        %p694 = scmp.lt.s32.totalorder %s39, 1
        %s695 = scalar_select %p694, %s39, 1
        %s696 = smul.addr %s695, 4
        %s697 = smul.addr %s696, 4
        %s698 = scalar_lea.vmem %s7, %s697
        %p699 = pneg %p249
        %p700 = pneg %p246
        %s701 = sand.u32 %s34, 1
        %s702 = scalar_lea.sflag [#allocation10], %s701
        %s703 = sand.u32 %s262, 1
        %s704 = scalar_lea.vmem [#allocation11], %s703
        %p705 = pneg %p275
        %p706 = pneg %p272
        %p707 = scmp.lt.s32.totalorder %s39, 1
        %s708 = scalar_select %p707, %s39, 1
        %s709 = smul.addr %s708, 8
        %s710 = smul.addr %s709, 4
        %s711 = scalar_lea.vmem %s9, %s710
        %p712 = pneg %p301
        %p713 = pneg %p298
        %p714 = scmp.lt.s32.totalorder %s39, 1
        %s715 = scalar_select %p714, %s39, 1
        %s716 = scalar_lea.vmem %s10, %s715
        %p717 = pneg %p327
        %p718 = pneg %p324
        %p719 = scmp.lt.s32.totalorder %s39, 1
        %s720 = scalar_select %p719, %s39, 1
        %s721 = scalar_lea.vmem %s11, %s720
        %p722 = pneg %p353
        %p723 = pneg %p350
        %p724 = scmp.lt.s32.totalorder %s39, 1
        %s725 = scalar_select %p724, %s39, 1
        %s726 = scalar_lea.vmem %s12, %s725
        %p727 = pneg %p379
        %p728 = pneg %p376
        %p729 = pneg %p400
        %p730 = pneg %p397
        %p731 = pneg %p421
        %p732 = pneg %p418
        %p733 = pneg %p447
        %p734 = pneg %p444
        %s735 = smul.u32 2, %s38
        %p736 = scmp.lt.s32.totalorder %s39, 1
        %s737 = scalar_select %p736, %s39, 1
        %s738 = smul.addr %s737, 4
        %s739 = smul.addr %s738, 4
        %s740 = scalar_lea.vmem %s1, %s739
        %p741 = scmp.lt.s32.totalorder %s39, 1
        %s742 = scalar_select %p741, %s39, 1
        %s743 = scalar_lea.vmem %s2, %s742
        %p744 = scmp.lt.s32.totalorder %s39, 1
        %s745 = scalar_select %p744, %s39, 1
        %s746 = smul.addr %s745, 4
        %s747 = smul.addr %s746, 4
        %s748 = scalar_lea.vmem %s3, %s747
        %p749 = scmp.lt.s32.totalorder %s39, 1
        %s750 = scalar_select %p749, %s39, 1
        %s751 = smul.addr %s750, 4
        %s752 = smul.addr %s751, 4
        %s753 = scalar_lea.vmem %s7, %s752
        %p754 = scmp.lt.s32.totalorder %s39, 1
        %s755 = scalar_select %p754, %s39, 1
        %s756 = smul.addr %s755, 8
        %s757 = smul.addr %s756, 4
        %s758 = scalar_lea.vmem %s9, %s757
        %p759 = scmp.lt.s32.totalorder %s39, 1
        %s760 = scalar_select %p759, %s39, 1
        %s761 = scalar_lea.vmem %s10, %s760
        %p762 = scmp.lt.s32.totalorder %s39, 1
        %s763 = scalar_select %p762, %s39, 1
        %s764 = scalar_lea.vmem %s11, %s763
        %p765 = scmp.lt.s32.totalorder %s39, 1
        %s766 = scalar_select %p765, %s39, 1
        %s767 = scalar_lea.vmem %s12, %s766
        %s768 = smul.u32 2, %s38
        %p770 = scmp.eq.s32.totalorder %s39, 0
        // Predicated region
        $region101: #{tpu_custom_call.1} parent=79 // pred_check
          %p771 = pneg %p770
        $region102: #{tpu_custom_call.1} parent=79 // pred_check_branch
          %773 = sbr.rel (%p771) target = $region104
        $region103: #{tpu_custom_call.1} parent=79 // pred_region
          %v774 = vld [vmem:[#allocation3] sm:$0xff]
          %v775 = vld [vmem:[#allocation3 + $0x8] sm:$0xff]
          %vm776 = vcmask 261120
          %777 = vst.msk [vmem:[#allocation2] sm:$0xff] %vm776, %v774
          %778 = vst.msk [vmem:[#allocation2 + $0x8] sm:$0xff] %vm776, %v775
        $region104: #{tpu_custom_call.1} parent=79 // pred_fallthru
          _
        %v779 = vld [vmem:[%s740] sm:$0xf]
        %v780 = vld [vmem:[%s740 + $0x4] sm:$0xf]
        %v781 = vld [vmem:[%s740 + $0x8] sm:$0xf]
        %v782 = vld [vmem:[%s740 + $0xc] sm:$0xf]
        %v783 = vld [vmem:[%s743] sm:$0x1]
        %v784 = vld [vmem:[%s748] sm:$0xf]
        %v785 = vld [vmem:[%s748 + $0x4] sm:$0xf]
        %v786 = vld [vmem:[%s748 + $0x8] sm:$0xf]
        %v787 = vld [vmem:[%s748 + $0xc] sm:$0xf]
        %v788 = vld [vmem:[%s626] sm:$0x1]
        %v789 = vld [vmem:[%s634] sm:$0x1]
        %v790 = vld [vmem:[%s642] sm:$0x1]
        %v791 = vld [vmem:[%s753] sm:$0xf]
        %v792 = vld [vmem:[%s753 + $0x4] sm:$0xf]
        %v793 = vld [vmem:[%s753 + $0x8] sm:$0xf]
        %v794 = vld [vmem:[%s753 + $0xc] sm:$0xf]
        %v795 = vld [vmem:[%s650] sm:$0x1]
        %v796 = vld [vmem:[%s758] sm:$0xf]
        %v797 = vld [vmem:[%s758 + $0x4] sm:$0xf]
        %v798 = vld [vmem:[%s758 + $0x8] sm:$0xf]
        %v799 = vld [vmem:[%s758 + $0xc] sm:$0xf]
        %v800 = vld [vmem:[%s758 + $0x10] sm:$0xf]
        %v801 = vld [vmem:[%s758 + $0x14] sm:$0xf]
        %v802 = vld [vmem:[%s758 + $0x18] sm:$0xf]
        %v803 = vld [vmem:[%s758 + $0x1c] sm:$0xf]
        %v804 = vld [vmem:[%s761] sm:$0x1]
        %v805 = vld [vmem:[%s764] sm:$0x1]
        %v806 = vld [vmem:[%s767] sm:$0x1]
        %v807 = vld [vmem:[#allocation2] sm:$0xff]
        %v808 = vld [vmem:[#allocation2 + $0x8] sm:$0xff]
        %v809 = vpack.c.bf16 %v808, %v807
        %v811 = vlaneseq
        %v812 = vshrl.u32 %v811, 7
        %v813 = vsub.s32 0, %v812
        %v814 = vrot.slane %v783, %v813
        %v820 = vunpack.c.l.b16 %v779
        %v821 = vunpack.c.l.b16 %v780
        %v822 = vunpack.c.l.b16 %v781
        %v823 = vunpack.c.l.b16 %v782
        %v824 = vpack.c.b16 %v821, %v820
        %v825 = vpack.c.b16 %v823, %v822
        %vm828 = vcmask 261120
        %v830 = vsel %vm828, %v809, 0
        %832 = vmatprep.subr.bf16.mxu0 0
        %833 = vmatpush1.bf16.msra.mxu0 %v824
        %834 = vmatprep.subr.bf16.mxu0 0
        %835 = vmatpush1.bf16.msra.mxu0 %v825
        %836 = vmatprep.subr.bf16.mxu0 0
        %837 = vmatpush1.bf16.msra.mxu0 0
        %838 = vmatprep.subr.bf16.mxu0 0
        %839 = vmatpush1.bf16.msra.mxu0 0
        %840 = vmatprep.subr.bf16.mxu0 0
        %841 = vmatpush1.bf16.msra.mxu0 0
        %842 = vmatprep.subr.bf16.mxu0 0
        %843 = vmatpush1.bf16.msra.mxu0 0
        %844 = vmatprep.subr.bf16.mxu0 0
        %845 = vmatpush1.bf16.msra.mxu0 0
        %846 = vmatprep.subr.bf16.mxu0 0
        %847 = vmatpush1.bf16.msra.mxu0 0
        %848 = vmatprep.subr.bf16.mxu0 0
        %849 = vmatpush1.bf16.msra.mxu0 0
        %850 = vmatprep.subr.bf16.mxu0 0
        %851 = vmatpush1.bf16.msra.mxu0 0
        %852 = vmatprep.subr.bf16.mxu0 0
        %853 = vmatpush1.bf16.msra.mxu0 0
        %854 = vmatprep.subr.bf16.mxu0 0
        %855 = vmatpush1.bf16.msra.mxu0 0
        %856 = vmatprep.subr.bf16.mxu0 0
        %857 = vmatpush1.bf16.msra.mxu0 0
        %858 = vmatprep.subr.bf16.mxu0 0
        %859 = vmatpush1.bf16.msra.mxu0 0
        %860 = vmatprep.subr.bf16.mxu0 0
        %861 = vmatpush1.bf16.msra.mxu0 0
        %862 = vmatprep.subr.bf16.mxu0 0
        %863 = vmatpush1.bf16.msra.mxu0 0
        %864 = vmatprep.mubr.bf16.mxu0 0
        %865 = vmatmul.mubr.bf16.gmra.mrb[0].mxu0 %v830
        %v866 = vpop.f32.mrb[0].mxu0
        %v867 = vadd.f32 %v814, %v866
        %v868 = vpop.f32.mrb[0].mxu0
        %v869 = vpop.f32.mrb[0].mxu0
        %v870 = vadd.f32 %v814, %v869
        %v871 = vpop.f32.mrb[0].mxu0
        %872 = vdwg.mxu0
        %v873 = vpack.c.bf16 %v867, %v867
        %v874 = vpack.c.bf16 %v870, %v870
        %876 = vrot.lane.b32.xlu0 %v873, 96
        %v877 = vpop.permute.xlu0 %876
        %vm878 = vcmask 64512
        %v880 = vsel %vm878, %v873, 0
        %v883 = vsel %vm878, %v877, 0
        %885 = vmatprep.subr.bf16.mxu0 0
        %886 = vmatpush1.bf16.xpose.msra.mxu0 %v883
        %887 = vmatprep.subr.bf16.mxu0 0
        %888 = vmatpush1.bf16.xpose.msra.mxu0 0
        %889 = vmatprep.subr.bf16.mxu0 0
        %890 = vmatpush1.bf16.xpose.msra.mxu0 0
        %891 = vmatprep.subr.bf16.mxu0 0
        %892 = vmatpush1.bf16.xpose.msra.mxu0 0
        %893 = vmatprep.subr.bf16.mxu0 0
        %894 = vmatpush1.bf16.xpose.msra.mxu0 0
        %895 = vmatprep.subr.bf16.mxu0 0
        %896 = vmatpush1.bf16.xpose.msra.mxu0 0
        %897 = vmatprep.subr.bf16.mxu0 0
        %898 = vmatpush1.bf16.xpose.msra.mxu0 0
        %899 = vmatprep.subr.bf16.mxu0 0
        %900 = vmatpush1.bf16.xpose.msra.mxu0 0
        %901 = vmatprep.subr.bf16.mxu0 0
        %902 = vmatpush1.bf16.xpose.msra.mxu0 0
        %903 = vmatprep.subr.bf16.mxu0 0
        %904 = vmatpush1.bf16.xpose.msra.mxu0 0
        %905 = vmatprep.subr.bf16.mxu0 0
        %906 = vmatpush1.bf16.xpose.msra.mxu0 0
        %907 = vmatprep.subr.bf16.mxu0 0
        %908 = vmatpush1.bf16.xpose.msra.mxu0 0
        %909 = vmatprep.subr.bf16.mxu0 0
        %910 = vmatpush1.bf16.xpose.msra.mxu0 0
        %911 = vmatprep.subr.bf16.mxu0 0
        %912 = vmatpush1.bf16.xpose.msra.mxu0 0
        %913 = vmatprep.subr.bf16.mxu0 0
        %914 = vmatpush1.bf16.xpose.msra.mxu0 0
        %915 = vmatprep.subr.bf16.mxu0 0
        %916 = vmatpush1.bf16.xpose.msra.mxu0 0
        %917 = vmatprep.mubr.bf16.mxu0 0
        %918 = vmatmul.mubr.bf16.gmra.mrb[0].mxu0 %v880
        %v919 = vpop.f32.mrb[0].mxu0
        %v920 = vadd.f32 0.0, %v919
        %v921 = vpop.f32.mrb[0].mxu0
        %v922 = vpop.f32.mrb[0].mxu0
        %v923 = vpop.f32.mrb[0].mxu0
        %924 = vdwg.mxu0
        %926 = vrot.lane.b32.xlu0 %v874, 96
        %v927 = vpop.permute.xlu0 %926
        %v929 = vsel %vm878, %v874, 0
        %v932 = vsel %vm878, %v927, 0
        %934 = vmatprep.subr.bf16.mxu0 0
        %935 = vmatpush1.bf16.xpose.msra.mxu0 %v932
        %936 = vmatprep.subr.bf16.mxu0 0
        %937 = vmatpush1.bf16.xpose.msra.mxu0 0
        %938 = vmatprep.subr.bf16.mxu0 0
        %939 = vmatpush1.bf16.xpose.msra.mxu0 0
        %940 = vmatprep.subr.bf16.mxu0 0
        %941 = vmatpush1.bf16.xpose.msra.mxu0 0
        %942 = vmatprep.subr.bf16.mxu0 0
        %943 = vmatpush1.bf16.xpose.msra.mxu0 0
        %944 = vmatprep.subr.bf16.mxu0 0
        %945 = vmatpush1.bf16.xpose.msra.mxu0 0
        %946 = vmatprep.subr.bf16.mxu0 0
        %947 = vmatpush1.bf16.xpose.msra.mxu0 0
        %948 = vmatprep.subr.bf16.mxu0 0
        %949 = vmatpush1.bf16.xpose.msra.mxu0 0
        %950 = vmatprep.subr.bf16.mxu0 0
        %951 = vmatpush1.bf16.xpose.msra.mxu0 0
        %952 = vmatprep.subr.bf16.mxu0 0
        %953 = vmatpush1.bf16.xpose.msra.mxu0 0
        %954 = vmatprep.subr.bf16.mxu0 0
        %955 = vmatpush1.bf16.xpose.msra.mxu0 0
        %956 = vmatprep.subr.bf16.mxu0 0
        %957 = vmatpush1.bf16.xpose.msra.mxu0 0
        %958 = vmatprep.subr.bf16.mxu0 0
        %959 = vmatpush1.bf16.xpose.msra.mxu0 0
        %960 = vmatprep.subr.bf16.mxu0 0
        %961 = vmatpush1.bf16.xpose.msra.mxu0 0
        %962 = vmatprep.subr.bf16.mxu0 0
        %963 = vmatpush1.bf16.xpose.msra.mxu0 0
        %964 = vmatprep.subr.bf16.mxu0 0
        %965 = vmatpush1.bf16.xpose.msra.mxu0 0
        %966 = vmatprep.mubr.bf16.mxu0 0
        %967 = vmatmul.mubr.bf16.gmra.mrb[0].mxu0 %v929
        %v968 = vpop.f32.mrb[0].mxu0
        %v969 = vadd.f32 0.0, %v968
        %v970 = vpop.f32.mrb[0].mxu0
        %v971 = vpop.f32.mrb[0].mxu0
        %v972 = vpop.f32.mrb[0].mxu0
        %973 = vdwg.mxu0
        %v974 = vsel %vm878, %v920, -inf
        %975 = vmax.xlane.f32.xlu0 %v974
        %v976 = vpop.xlane.xlu0 %975
        %v977 = vsel %vm878, %v969, -inf
        %978 = vmax.xlane.f32.xlu0 %v977
        %v979 = vpop.xlane.xlu0 %978
        %v980 = vsub.f32 %v920, %v976
        %v981 = vsub.f32 %v969, %v979
        %v982 = vmul.f32 %v980, 1.442695
        %v983 = vpow.pop %v982
        %v984 = vmul.f32 %v981, 1.442695
        %v985 = vpow.pop %v984
        %v986 = vsel %vm878, %v983, 0.0
        %987 = vadd.xlane.f32.xlu0 %v986
        %v988 = vpop.xlane.xlu0 %987
        %v989 = vsel %vm878, %v985, 0.0
        %990 = vadd.xlane.f32.xlu0 %v989
        %v991 = vpop.xlane.xlu0 %990
        %v992 = vrcp.pop %v988
        %v993 = vrcp.pop %v991
        %v994 = vmul.f32 %v983, %v992
        %v995 = vmul.f32 %v985, %v993
        %v996 = vpack.c.bf16 %v994, %v994
        %v997 = vpack.c.bf16 %v995, %v995
        %998 = vrot.lane.b32.xlu0 %v873, 64
        %v999 = vpop.permute.xlu0 %998
        %v1001 = vsel %vm878, %v996, 0
        %vm1003 = vcmask 1043456
        %v1005 = vsel %vm1003, %v999, 0
        %1007 = vmatprep.subr.bf16.mxu0 0
        %1008 = vmatpush1.bf16.msra.mxu0 %v1005
        %1009 = vmatprep.subr.bf16.mxu0 0
        %1010 = vmatpush1.bf16.msra.mxu0 0
        %1011 = vmatprep.subr.bf16.mxu0 0
        %1012 = vmatpush1.bf16.msra.mxu0 0
        %1013 = vmatprep.subr.bf16.mxu0 0
        %1014 = vmatpush1.bf16.msra.mxu0 0
        %1015 = vmatprep.subr.bf16.mxu0 0
        %1016 = vmatpush1.bf16.msra.mxu0 0
        %1017 = vmatprep.subr.bf16.mxu0 0
        %1018 = vmatpush1.bf16.msra.mxu0 0
        %1019 = vmatprep.subr.bf16.mxu0 0
        %1020 = vmatpush1.bf16.msra.mxu0 0
        %1021 = vmatprep.subr.bf16.mxu0 0
        %1022 = vmatpush1.bf16.msra.mxu0 0
        %1023 = vmatprep.subr.bf16.mxu0 0
        %1024 = vmatpush1.bf16.msra.mxu0 0
        %1025 = vmatprep.subr.bf16.mxu0 0
        %1026 = vmatpush1.bf16.msra.mxu0 0
        %1027 = vmatprep.subr.bf16.mxu0 0
        %1028 = vmatpush1.bf16.msra.mxu0 0
        %1029 = vmatprep.subr.bf16.mxu0 0
        %1030 = vmatpush1.bf16.msra.mxu0 0
        %1031 = vmatprep.subr.bf16.mxu0 0
        %1032 = vmatpush1.bf16.msra.mxu0 0
        %1033 = vmatprep.subr.bf16.mxu0 0
        %1034 = vmatpush1.bf16.msra.mxu0 0
        %1035 = vmatprep.subr.bf16.mxu0 0
        %1036 = vmatpush1.bf16.msra.mxu0 0
        %1037 = vmatprep.subr.bf16.mxu0 0
        %1038 = vmatpush1.bf16.msra.mxu0 0
        %1039 = vmatprep.mubr.bf16.mxu0 0
        %1040 = vmatmul.mubr.bf16.gmra.mrb[0].mxu0 %v1001
        %v1041 = vpop.f32.mrb[0].mxu0
        %v1042 = vadd.f32 0.0, %v1041
        %v1043 = vpop.f32.mrb[0].mxu0
        %v1044 = vpop.f32.mrb[0].mxu0
        %v1045 = vpop.f32.mrb[0].mxu0
        %1046 = vdwg.mxu0
        %1047 = vrot.lane.b32.xlu0 %v874, 64
        %v1048 = vpop.permute.xlu0 %1047
        %v1050 = vsel %vm878, %v997, 0
        %v1053 = vsel %vm1003, %v1048, 0
        %1055 = vmatprep.subr.bf16.mxu0 0
        %1056 = vmatpush1.bf16.msra.mxu0 %v1053
        %1057 = vmatprep.subr.bf16.mxu0 0
        %1058 = vmatpush1.bf16.msra.mxu0 0
        %1059 = vmatprep.subr.bf16.mxu0 0
        %1060 = vmatpush1.bf16.msra.mxu0 0
        %1061 = vmatprep.subr.bf16.mxu0 0
        %1062 = vmatpush1.bf16.msra.mxu0 0
        %1063 = vmatprep.subr.bf16.mxu0 0
        %1064 = vmatpush1.bf16.msra.mxu0 0
        %1065 = vmatprep.subr.bf16.mxu0 0
        %1066 = vmatpush1.bf16.msra.mxu0 0
        %1067 = vmatprep.subr.bf16.mxu0 0
        %1068 = vmatpush1.bf16.msra.mxu0 0
        %1069 = vmatprep.subr.bf16.mxu0 0
        %1070 = vmatpush1.bf16.msra.mxu0 0
        %1071 = vmatprep.subr.bf16.mxu0 0
        %1072 = vmatpush1.bf16.msra.mxu0 0
        %1073 = vmatprep.subr.bf16.mxu0 0
        %1074 = vmatpush1.bf16.msra.mxu0 0
        %1075 = vmatprep.subr.bf16.mxu0 0
        %1076 = vmatpush1.bf16.msra.mxu0 0
        %1077 = vmatprep.subr.bf16.mxu0 0
        %1078 = vmatpush1.bf16.msra.mxu0 0
        %1079 = vmatprep.subr.bf16.mxu0 0
        %1080 = vmatpush1.bf16.msra.mxu0 0
        %1081 = vmatprep.subr.bf16.mxu0 0
        %1082 = vmatpush1.bf16.msra.mxu0 0
        %1083 = vmatprep.subr.bf16.mxu0 0
        %1084 = vmatpush1.bf16.msra.mxu0 0
        %1085 = vmatprep.subr.bf16.mxu0 0
        %1086 = vmatpush1.bf16.msra.mxu0 0
        %1087 = vmatprep.mubr.bf16.mxu0 0
        %1088 = vmatmul.mubr.bf16.gmra.mrb[0].mxu0 %v1050
        %v1089 = vpop.f32.mrb[0].mxu0
        %v1090 = vadd.f32 0.0, %v1089
        %v1091 = vpop.f32.mrb[0].mxu0
        %v1092 = vpop.f32.mrb[0].mxu0
        %v1093 = vpop.f32.mrb[0].mxu0
        %1094 = vdwg.mxu0
        %1095 = vrot.lane.b32.xlu0 %v873, 120
        %v1096 = vpop.permute.xlu0 %1095
        %1097 = vrot.lane.b32.xlu0 %v873, 88
        %v1098 = vpop.permute.xlu0 %1097
        %v1100 = vsel %vm878, %v1096, 0
        %v1103 = vsel %vm878, %v1098, 0
        %1105 = vmatprep.subr.bf16.mxu0 0
        %1106 = vmatpush1.bf16.xpose.msra.mxu0 %v1103
        %1107 = vmatprep.subr.bf16.mxu0 0
        %1108 = vmatpush1.bf16.xpose.msra.mxu0 0
        %1109 = vmatprep.subr.bf16.mxu0 0
        %1110 = vmatpush1.bf16.xpose.msra.mxu0 0
        %1111 = vmatprep.subr.bf16.mxu0 0
        %1112 = vmatpush1.bf16.xpose.msra.mxu0 0
        %1113 = vmatprep.subr.bf16.mxu0 0
        %1114 = vmatpush1.bf16.xpose.msra.mxu0 0
        %1115 = vmatprep.subr.bf16.mxu0 0
        %1116 = vmatpush1.bf16.xpose.msra.mxu0 0
        %1117 = vmatprep.subr.bf16.mxu0 0
        %1118 = vmatpush1.bf16.xpose.msra.mxu0 0
        %1119 = vmatprep.subr.bf16.mxu0 0
        %1120 = vmatpush1.bf16.xpose.msra.mxu0 0
        %1121 = vmatprep.subr.bf16.mxu0 0
        %1122 = vmatpush1.bf16.xpose.msra.mxu0 0
        %1123 = vmatprep.subr.bf16.mxu0 0
        %1124 = vmatpush1.bf16.xpose.msra.mxu0 0
        %1125 = vmatprep.subr.bf16.mxu0 0
        %1126 = vmatpush1.bf16.xpose.msra.mxu0 0
        %1127 = vmatprep.subr.bf16.mxu0 0
        %1128 = vmatpush1.bf16.xpose.msra.mxu0 0
        %1129 = vmatprep.subr.bf16.mxu0 0
        %1130 = vmatpush1.bf16.xpose.msra.mxu0 0
        %1131 = vmatprep.subr.bf16.mxu0 0
        %1132 = vmatpush1.bf16.xpose.msra.mxu0 0
        %1133 = vmatprep.subr.bf16.mxu0 0
        %1134 = vmatpush1.bf16.xpose.msra.mxu0 0
        %1135 = vmatprep.subr.bf16.mxu0 0
        %1136 = vmatpush1.bf16.xpose.msra.mxu0 0
        %1137 = vmatprep.mubr.bf16.mxu0 0
        %1138 = vmatmul.mubr.bf16.gmra.mrb[0].mxu0 %v1100
        %v1139 = vpop.f32.mrb[0].mxu0
        %v1140 = vadd.f32 0.0, %v1139
        %v1141 = vpop.f32.mrb[0].mxu0
        %v1142 = vpop.f32.mrb[0].mxu0
        %v1143 = vpop.f32.mrb[0].mxu0
        %1144 = vdwg.mxu0
        %1145 = vrot.lane.b32.xlu0 %v874, 120
        %v1146 = vpop.permute.xlu0 %1145
        %1147 = vrot.lane.b32.xlu0 %v874, 88
        %v1148 = vpop.permute.xlu0 %1147
        %v1150 = vsel %vm878, %v1146, 0
        %v1153 = vsel %vm878, %v1148, 0
        %1155 = vmatprep.subr.bf16.mxu0 0
        %1156 = vmatpush1.bf16.xpose.msra.mxu0 %v1153
        %1157 = vmatprep.subr.bf16.mxu0 0
        %1158 = vmatpush1.bf16.xpose.msra.mxu0 0
        %1159 = vmatprep.subr.bf16.mxu0 0
        %1160 = vmatpush1.bf16.xpose.msra.mxu0 0
        %1161 = vmatprep.subr.bf16.mxu0 0
        %1162 = vmatpush1.bf16.xpose.msra.mxu0 0
        %1163 = vmatprep.subr.bf16.mxu0 0
        %1164 = vmatpush1.bf16.xpose.msra.mxu0 0
        %1165 = vmatprep.subr.bf16.mxu0 0
        %1166 = vmatpush1.bf16.xpose.msra.mxu0 0
        %1167 = vmatprep.subr.bf16.mxu0 0
        %1168 = vmatpush1.bf16.xpose.msra.mxu0 0
        %1169 = vmatprep.subr.bf16.mxu0 0
        %1170 = vmatpush1.bf16.xpose.msra.mxu0 0
        %1171 = vmatprep.subr.bf16.mxu0 0
        %1172 = vmatpush1.bf16.xpose.msra.mxu0 0
        %1173 = vmatprep.subr.bf16.mxu0 0
        %1174 = vmatpush1.bf16.xpose.msra.mxu0 0
        %1175 = vmatprep.subr.bf16.mxu0 0
        %1176 = vmatpush1.bf16.xpose.msra.mxu0 0
        %1177 = vmatprep.subr.bf16.mxu0 0
        %1178 = vmatpush1.bf16.xpose.msra.mxu0 0
        %1179 = vmatprep.subr.bf16.mxu0 0
        %1180 = vmatpush1.bf16.xpose.msra.mxu0 0
        %1181 = vmatprep.subr.bf16.mxu0 0
        %1182 = vmatpush1.bf16.xpose.msra.mxu0 0
        %1183 = vmatprep.subr.bf16.mxu0 0
        %1184 = vmatpush1.bf16.xpose.msra.mxu0 0
        %1185 = vmatprep.subr.bf16.mxu0 0
        %1186 = vmatpush1.bf16.xpose.msra.mxu0 0
        %1187 = vmatprep.mubr.bf16.mxu0 0
        %1188 = vmatmul.mubr.bf16.gmra.mrb[0].mxu0 %v1150
        %v1189 = vpop.f32.mrb[0].mxu0
        %v1190 = vadd.f32 0.0, %v1189
        %v1191 = vpop.f32.mrb[0].mxu0
        %v1192 = vpop.f32.mrb[0].mxu0
        %v1193 = vpop.f32.mrb[0].mxu0
        %1194 = vdwg.mxu0
        %v1195 = vsel %vm878, %v1140, -inf
        %1196 = vmax.xlane.f32.xlu0 %v1195
        %v1197 = vpop.xlane.xlu0 %1196
        %v1198 = vsel %vm878, %v1190, -inf
        %1199 = vmax.xlane.f32.xlu0 %v1198
        %v1200 = vpop.xlane.xlu0 %1199
        %v1201 = vsub.f32 %v1140, %v1197
        %v1202 = vsub.f32 %v1190, %v1200
        %v1203 = vmul.f32 %v1201, 1.442695
        %v1204 = vpow.pop %v1203
        %v1205 = vmul.f32 %v1202, 1.442695
        %v1206 = vpow.pop %v1205
        %v1207 = vsel %vm878, %v1204, 0.0
        %1208 = vadd.xlane.f32.xlu0 %v1207
        %v1209 = vpop.xlane.xlu0 %1208
        %v1210 = vsel %vm878, %v1206, 0.0
        %1211 = vadd.xlane.f32.xlu0 %v1210
        %v1212 = vpop.xlane.xlu0 %1211
        %v1213 = vrcp.pop %v1209
        %v1214 = vrcp.pop %v1212
        %v1215 = vmul.f32 %v1204, %v1213
        %v1216 = vmul.f32 %v1206, %v1214
        %v1217 = vpack.c.bf16 %v1215, %v1215
        %v1218 = vpack.c.bf16 %v1216, %v1216
        %1219 = vrot.lane.b32.xlu0 %v873, 56
        %v1220 = vpop.permute.xlu0 %1219
        %v1222 = vsel %vm878, %v1217, 0
        %v1225 = vsel %vm1003, %v1220, 0
        %1227 = vmatprep.subr.bf16.mxu0 0
        %1228 = vmatpush1.bf16.msra.mxu0 %v1225
        %1229 = vmatprep.subr.bf16.mxu0 0
        %1230 = vmatpush1.bf16.msra.mxu0 0
        %1231 = vmatprep.subr.bf16.mxu0 0
        %1232 = vmatpush1.bf16.msra.mxu0 0
        %1233 = vmatprep.subr.bf16.mxu0 0
        %1234 = vmatpush1.bf16.msra.mxu0 0
        %1235 = vmatprep.subr.bf16.mxu0 0
        %1236 = vmatpush1.bf16.msra.mxu0 0
        %1237 = vmatprep.subr.bf16.mxu0 0
        %1238 = vmatpush1.bf16.msra.mxu0 0
        %1239 = vmatprep.subr.bf16.mxu0 0
        %1240 = vmatpush1.bf16.msra.mxu0 0
        %1241 = vmatprep.subr.bf16.mxu0 0
        %1242 = vmatpush1.bf16.msra.mxu0 0
        %1243 = vmatprep.subr.bf16.mxu0 0
        %1244 = vmatpush1.bf16.msra.mxu0 0
        %1245 = vmatprep.subr.bf16.mxu0 0
        %1246 = vmatpush1.bf16.msra.mxu0 0
        %1247 = vmatprep.subr.bf16.mxu0 0
        %1248 = vmatpush1.bf16.msra.mxu0 0
        %1249 = vmatprep.subr.bf16.mxu0 0
        %1250 = vmatpush1.bf16.msra.mxu0 0
        %1251 = vmatprep.subr.bf16.mxu0 0
        %1252 = vmatpush1.bf16.msra.mxu0 0
        %1253 = vmatprep.subr.bf16.mxu0 0
        %1254 = vmatpush1.bf16.msra.mxu0 0
        %1255 = vmatprep.subr.bf16.mxu0 0
        %1256 = vmatpush1.bf16.msra.mxu0 0
        %1257 = vmatprep.subr.bf16.mxu0 0
        %1258 = vmatpush1.bf16.msra.mxu0 0
        %1259 = vmatprep.mubr.bf16.mxu0 0
        %1260 = vmatmul.mubr.bf16.gmra.mrb[0].mxu0 %v1222
        %v1261 = vpop.f32.mrb[0].mxu0
        %v1262 = vadd.f32 0.0, %v1261
        %v1263 = vpop.f32.mrb[0].mxu0
        %v1264 = vpop.f32.mrb[0].mxu0
        %v1265 = vpop.f32.mrb[0].mxu0
        %1266 = vdwg.mxu0
        %1267 = vrot.lane.b32.xlu0 %v874, 56
        %v1268 = vpop.permute.xlu0 %1267
        %v1270 = vsel %vm878, %v1218, 0
        %v1273 = vsel %vm1003, %v1268, 0
        %1275 = vmatprep.subr.bf16.mxu0 0
        %1276 = vmatpush1.bf16.msra.mxu0 %v1273
        %1277 = vmatprep.subr.bf16.mxu0 0
        %1278 = vmatpush1.bf16.msra.mxu0 0
        %1279 = vmatprep.subr.bf16.mxu0 0
        %1280 = vmatpush1.bf16.msra.mxu0 0
        %1281 = vmatprep.subr.bf16.mxu0 0
        %1282 = vmatpush1.bf16.msra.mxu0 0
        %1283 = vmatprep.subr.bf16.mxu0 0
        %1284 = vmatpush1.bf16.msra.mxu0 0
        %1285 = vmatprep.subr.bf16.mxu0 0
        %1286 = vmatpush1.bf16.msra.mxu0 0
        %1287 = vmatprep.subr.bf16.mxu0 0
        %1288 = vmatpush1.bf16.msra.mxu0 0
        %1289 = vmatprep.subr.bf16.mxu0 0
        %1290 = vmatpush1.bf16.msra.mxu0 0
        %1291 = vmatprep.subr.bf16.mxu0 0
        %1292 = vmatpush1.bf16.msra.mxu0 0
        %1293 = vmatprep.subr.bf16.mxu0 0
        %1294 = vmatpush1.bf16.msra.mxu0 0
        %1295 = vmatprep.subr.bf16.mxu0 0
        %1296 = vmatpush1.bf16.msra.mxu0 0
        %1297 = vmatprep.subr.bf16.mxu0 0
        %1298 = vmatpush1.bf16.msra.mxu0 0
        %1299 = vmatprep.subr.bf16.mxu0 0
        %1300 = vmatpush1.bf16.msra.mxu0 0
        %1301 = vmatprep.subr.bf16.mxu0 0
        %1302 = vmatpush1.bf16.msra.mxu0 0
        %1303 = vmatprep.subr.bf16.mxu0 0
        %1304 = vmatpush1.bf16.msra.mxu0 0
        %1305 = vmatprep.subr.bf16.mxu0 0
        %1306 = vmatpush1.bf16.msra.mxu0 0
        %1307 = vmatprep.mubr.bf16.mxu0 0
        %1308 = vmatmul.mubr.bf16.gmra.mrb[0].mxu0 %v1270
        %v1309 = vpop.f32.mrb[0].mxu0
        %v1310 = vadd.f32 0.0, %v1309
        %v1311 = vpop.f32.mrb[0].mxu0
        %v1312 = vpop.f32.mrb[0].mxu0
        %v1313 = vpop.f32.mrb[0].mxu0
        %1314 = vdwg.mxu0
        %1315 = vrot.lane.b32.xlu0 %v873, 112
        %v1316 = vpop.permute.xlu0 %1315
        %1317 = vrot.lane.b32.xlu0 %v873, 80
        %v1318 = vpop.permute.xlu0 %1317
        %v1320 = vsel %vm878, %v1316, 0
        %v1323 = vsel %vm878, %v1318, 0
        %1325 = vmatprep.subr.bf16.mxu0 0
        %1326 = vmatpush1.bf16.xpose.msra.mxu0 %v1323
        %1327 = vmatprep.subr.bf16.mxu0 0
        %1328 = vmatpush1.bf16.xpose.msra.mxu0 0
        %1329 = vmatprep.subr.bf16.mxu0 0
        %1330 = vmatpush1.bf16.xpose.msra.mxu0 0
        %1331 = vmatprep.subr.bf16.mxu0 0
        %1332 = vmatpush1.bf16.xpose.msra.mxu0 0
        %1333 = vmatprep.subr.bf16.mxu0 0
        %1334 = vmatpush1.bf16.xpose.msra.mxu0 0
        %1335 = vmatprep.subr.bf16.mxu0 0
        %1336 = vmatpush1.bf16.xpose.msra.mxu0 0
        %1337 = vmatprep.subr.bf16.mxu0 0
        %1338 = vmatpush1.bf16.xpose.msra.mxu0 0
        %1339 = vmatprep.subr.bf16.mxu0 0
        %1340 = vmatpush1.bf16.xpose.msra.mxu0 0
        %1341 = vmatprep.subr.bf16.mxu0 0
        %1342 = vmatpush1.bf16.xpose.msra.mxu0 0
        %1343 = vmatprep.subr.bf16.mxu0 0
        %1344 = vmatpush1.bf16.xpose.msra.mxu0 0
        %1345 = vmatprep.subr.bf16.mxu0 0
        %1346 = vmatpush1.bf16.xpose.msra.mxu0 0
        %1347 = vmatprep.subr.bf16.mxu0 0
        %1348 = vmatpush1.bf16.xpose.msra.mxu0 0
        %1349 = vmatprep.subr.bf16.mxu0 0
        %1350 = vmatpush1.bf16.xpose.msra.mxu0 0
        %1351 = vmatprep.subr.bf16.mxu0 0
        %1352 = vmatpush1.bf16.xpose.msra.mxu0 0
        %1353 = vmatprep.subr.bf16.mxu0 0
        %1354 = vmatpush1.bf16.xpose.msra.mxu0 0
        %1355 = vmatprep.subr.bf16.mxu0 0
        %1356 = vmatpush1.bf16.xpose.msra.mxu0 0
        %1357 = vmatprep.mubr.bf16.mxu0 0
        %1358 = vmatmul.mubr.bf16.gmra.mrb[0].mxu0 %v1320
        %v1359 = vpop.f32.mrb[0].mxu0
        %v1360 = vadd.f32 0.0, %v1359
        %v1361 = vpop.f32.mrb[0].mxu0
        %v1362 = vpop.f32.mrb[0].mxu0
        %v1363 = vpop.f32.mrb[0].mxu0
        %1364 = vdwg.mxu0
        %1365 = vrot.lane.b32.xlu0 %v874, 112
        %v1366 = vpop.permute.xlu0 %1365
        %1367 = vrot.lane.b32.xlu0 %v874, 80
        %v1368 = vpop.permute.xlu0 %1367
        %v1370 = vsel %vm878, %v1366, 0
        %v1373 = vsel %vm878, %v1368, 0
        %1375 = vmatprep.subr.bf16.mxu0 0
        %1376 = vmatpush1.bf16.xpose.msra.mxu0 %v1373
        %1377 = vmatprep.subr.bf16.mxu0 0
        %1378 = vmatpush1.bf16.xpose.msra.mxu0 0
        %1379 = vmatprep.subr.bf16.mxu0 0
        %1380 = vmatpush1.bf16.xpose.msra.mxu0 0
        %1381 = vmatprep.subr.bf16.mxu0 0
        %1382 = vmatpush1.bf16.xpose.msra.mxu0 0
        %1383 = vmatprep.subr.bf16.mxu0 0
        %1384 = vmatpush1.bf16.xpose.msra.mxu0 0
        %1385 = vmatprep.subr.bf16.mxu0 0
        %1386 = vmatpush1.bf16.xpose.msra.mxu0 0
        %1387 = vmatprep.subr.bf16.mxu0 0
        %1388 = vmatpush1.bf16.xpose.msra.mxu0 0
        %1389 = vmatprep.subr.bf16.mxu0 0
        %1390 = vmatpush1.bf16.xpose.msra.mxu0 0
        %1391 = vmatprep.subr.bf16.mxu0 0
        %1392 = vmatpush1.bf16.xpose.msra.mxu0 0
        %1393 = vmatprep.subr.bf16.mxu0 0
        %1394 = vmatpush1.bf16.xpose.msra.mxu0 0
        %1395 = vmatprep.subr.bf16.mxu0 0
        %1396 = vmatpush1.bf16.xpose.msra.mxu0 0
        %1397 = vmatprep.subr.bf16.mxu0 0
        %1398 = vmatpush1.bf16.xpose.msra.mxu0 0
        %1399 = vmatprep.subr.bf16.mxu0 0
        %1400 = vmatpush1.bf16.xpose.msra.mxu0 0
        %1401 = vmatprep.subr.bf16.mxu0 0
        %1402 = vmatpush1.bf16.xpose.msra.mxu0 0
        %1403 = vmatprep.subr.bf16.mxu0 0
        %1404 = vmatpush1.bf16.xpose.msra.mxu0 0
        %1405 = vmatprep.subr.bf16.mxu0 0
        %1406 = vmatpush1.bf16.xpose.msra.mxu0 0
        %1407 = vmatprep.mubr.bf16.mxu0 0
        %1408 = vmatmul.mubr.bf16.gmra.mrb[0].mxu0 %v1370
        %v1409 = vpop.f32.mrb[0].mxu0
        %v1410 = vadd.f32 0.0, %v1409
        %v1411 = vpop.f32.mrb[0].mxu0
        %v1412 = vpop.f32.mrb[0].mxu0
        %v1413 = vpop.f32.mrb[0].mxu0
        %1414 = vdwg.mxu0
        %v1415 = vsel %vm878, %v1360, -inf
        %1416 = vmax.xlane.f32.xlu0 %v1415
        %v1417 = vpop.xlane.xlu0 %1416
        %v1418 = vsel %vm878, %v1410, -inf
        %1419 = vmax.xlane.f32.xlu0 %v1418
        %v1420 = vpop.xlane.xlu0 %1419
        %v1421 = vsub.f32 %v1360, %v1417
        %v1422 = vsub.f32 %v1410, %v1420
        %v1423 = vmul.f32 %v1421, 1.442695
        %v1424 = vpow.pop %v1423
        %v1425 = vmul.f32 %v1422, 1.442695
        %v1426 = vpow.pop %v1425
        %v1427 = vsel %vm878, %v1424, 0.0
        %1428 = vadd.xlane.f32.xlu0 %v1427
        %v1429 = vpop.xlane.xlu0 %1428
        %v1430 = vsel %vm878, %v1426, 0.0
        %1431 = vadd.xlane.f32.xlu0 %v1430
        %v1432 = vpop.xlane.xlu0 %1431
        %v1433 = vrcp.pop %v1429
        %v1434 = vrcp.pop %v1432
        %v1435 = vmul.f32 %v1424, %v1433
        %v1436 = vmul.f32 %v1426, %v1434
        %v1437 = vpack.c.bf16 %v1435, %v1435
        %v1438 = vpack.c.bf16 %v1436, %v1436
        %1439 = vrot.lane.b32.xlu0 %v873, 48
        %v1440 = vpop.permute.xlu0 %1439
        %v1442 = vsel %vm878, %v1437, 0
        %v1445 = vsel %vm1003, %v1440, 0
        %1447 = vmatprep.subr.bf16.mxu0 0
        %1448 = vmatpush1.bf16.msra.mxu0 %v1445
        %1449 = vmatprep.subr.bf16.mxu0 0
        %1450 = vmatpush1.bf16.msra.mxu0 0
        %1451 = vmatprep.subr.bf16.mxu0 0
        %1452 = vmatpush1.bf16.msra.mxu0 0
        %1453 = vmatprep.subr.bf16.mxu0 0
        %1454 = vmatpush1.bf16.msra.mxu0 0
        %1455 = vmatprep.subr.bf16.mxu0 0
        %1456 = vmatpush1.bf16.msra.mxu0 0
        %1457 = vmatprep.subr.bf16.mxu0 0
        %1458 = vmatpush1.bf16.msra.mxu0 0
        %1459 = vmatprep.subr.bf16.mxu0 0
        %1460 = vmatpush1.bf16.msra.mxu0 0
        %1461 = vmatprep.subr.bf16.mxu0 0
        %1462 = vmatpush1.bf16.msra.mxu0 0
        %1463 = vmatprep.subr.bf16.mxu0 0
        %1464 = vmatpush1.bf16.msra.mxu0 0
        %1465 = vmatprep.subr.bf16.mxu0 0
        %1466 = vmatpush1.bf16.msra.mxu0 0
        %1467 = vmatprep.subr.bf16.mxu0 0
        %1468 = vmatpush1.bf16.msra.mxu0 0
        %1469 = vmatprep.subr.bf16.mxu0 0
        %1470 = vmatpush1.bf16.msra.mxu0 0
        %1471 = vmatprep.subr.bf16.mxu0 0
        %1472 = vmatpush1.bf16.msra.mxu0 0
        %1473 = vmatprep.subr.bf16.mxu0 0
        %1474 = vmatpush1.bf16.msra.mxu0 0
        %1475 = vmatprep.subr.bf16.mxu0 0
        %1476 = vmatpush1.bf16.msra.mxu0 0
        %1477 = vmatprep.subr.bf16.mxu0 0
        %1478 = vmatpush1.bf16.msra.mxu0 0
        %1479 = vmatprep.mubr.bf16.mxu0 0
        %1480 = vmatmul.mubr.bf16.gmra.mrb[0].mxu0 %v1442
        %v1481 = vpop.f32.mrb[0].mxu0
        %v1482 = vadd.f32 0.0, %v1481
        %v1483 = vpop.f32.mrb[0].mxu0
        %v1484 = vpop.f32.mrb[0].mxu0
        %v1485 = vpop.f32.mrb[0].mxu0
        %1486 = vdwg.mxu0
        %1487 = vrot.lane.b32.xlu0 %v874, 48
        %v1488 = vpop.permute.xlu0 %1487
        %v1490 = vsel %vm878, %v1438, 0
        %v1493 = vsel %vm1003, %v1488, 0
        %1495 = vmatprep.subr.bf16.mxu0 0
        %1496 = vmatpush1.bf16.msra.mxu0 %v1493
        %1497 = vmatprep.subr.bf16.mxu0 0
        %1498 = vmatpush1.bf16.msra.mxu0 0
        %1499 = vmatprep.subr.bf16.mxu0 0
        %1500 = vmatpush1.bf16.msra.mxu0 0
        %1501 = vmatprep.subr.bf16.mxu0 0
        %1502 = vmatpush1.bf16.msra.mxu0 0
        %1503 = vmatprep.subr.bf16.mxu0 0
        %1504 = vmatpush1.bf16.msra.mxu0 0
        %1505 = vmatprep.subr.bf16.mxu0 0
        %1506 = vmatpush1.bf16.msra.mxu0 0
        %1507 = vmatprep.subr.bf16.mxu0 0
        %1508 = vmatpush1.bf16.msra.mxu0 0
        %1509 = vmatprep.subr.bf16.mxu0 0
        %1510 = vmatpush1.bf16.msra.mxu0 0
        %1511 = vmatprep.subr.bf16.mxu0 0
        %1512 = vmatpush1.bf16.msra.mxu0 0
        %1513 = vmatprep.subr.bf16.mxu0 0
        %1514 = vmatpush1.bf16.msra.mxu0 0
        %1515 = vmatprep.subr.bf16.mxu0 0
        %1516 = vmatpush1.bf16.msra.mxu0 0
        %1517 = vmatprep.subr.bf16.mxu0 0
        %1518 = vmatpush1.bf16.msra.mxu0 0
        %1519 = vmatprep.subr.bf16.mxu0 0
        %1520 = vmatpush1.bf16.msra.mxu0 0
        %1521 = vmatprep.subr.bf16.mxu0 0
        %1522 = vmatpush1.bf16.msra.mxu0 0
        %1523 = vmatprep.subr.bf16.mxu0 0
        %1524 = vmatpush1.bf16.msra.mxu0 0
        %1525 = vmatprep.subr.bf16.mxu0 0
        %1526 = vmatpush1.bf16.msra.mxu0 0
        %1527 = vmatprep.mubr.bf16.mxu0 0
        %1528 = vmatmul.mubr.bf16.gmra.mrb[0].mxu0 %v1490
        %v1529 = vpop.f32.mrb[0].mxu0
        %v1530 = vadd.f32 0.0, %v1529
        %v1531 = vpop.f32.mrb[0].mxu0
        %v1532 = vpop.f32.mrb[0].mxu0
        %v1533 = vpop.f32.mrb[0].mxu0
        %1534 = vdwg.mxu0
        %1535 = vrot.lane.b32.xlu0 %v873, 104
        %v1536 = vpop.permute.xlu0 %1535
        %1537 = vrot.lane.b32.xlu0 %v873, 72
        %v1538 = vpop.permute.xlu0 %1537
        %v1540 = vsel %vm878, %v1536, 0
        %v1543 = vsel %vm878, %v1538, 0
        %1545 = vmatprep.subr.bf16.mxu0 0
        %1546 = vmatpush1.bf16.xpose.msra.mxu0 %v1543
        %1547 = vmatprep.subr.bf16.mxu0 0
        %1548 = vmatpush1.bf16.xpose.msra.mxu0 0
        %1549 = vmatprep.subr.bf16.mxu0 0
        %1550 = vmatpush1.bf16.xpose.msra.mxu0 0
        %1551 = vmatprep.subr.bf16.mxu0 0
        %1552 = vmatpush1.bf16.xpose.msra.mxu0 0
        %1553 = vmatprep.subr.bf16.mxu0 0
        %1554 = vmatpush1.bf16.xpose.msra.mxu0 0
        %1555 = vmatprep.subr.bf16.mxu0 0
        %1556 = vmatpush1.bf16.xpose.msra.mxu0 0
        %1557 = vmatprep.subr.bf16.mxu0 0
        %1558 = vmatpush1.bf16.xpose.msra.mxu0 0
        %1559 = vmatprep.subr.bf16.mxu0 0
        %1560 = vmatpush1.bf16.xpose.msra.mxu0 0
        %1561 = vmatprep.subr.bf16.mxu0 0
        %1562 = vmatpush1.bf16.xpose.msra.mxu0 0
        %1563 = vmatprep.subr.bf16.mxu0 0
        %1564 = vmatpush1.bf16.xpose.msra.mxu0 0
        %1565 = vmatprep.subr.bf16.mxu0 0
        %1566 = vmatpush1.bf16.xpose.msra.mxu0 0
        %1567 = vmatprep.subr.bf16.mxu0 0
        %1568 = vmatpush1.bf16.xpose.msra.mxu0 0
        %1569 = vmatprep.subr.bf16.mxu0 0
        %1570 = vmatpush1.bf16.xpose.msra.mxu0 0
        %1571 = vmatprep.subr.bf16.mxu0 0
        %1572 = vmatpush1.bf16.xpose.msra.mxu0 0
        %1573 = vmatprep.subr.bf16.mxu0 0
        %1574 = vmatpush1.bf16.xpose.msra.mxu0 0
        %1575 = vmatprep.subr.bf16.mxu0 0
        %1576 = vmatpush1.bf16.xpose.msra.mxu0 0
        %1577 = vmatprep.mubr.bf16.mxu0 0
        %1578 = vmatmul.mubr.bf16.gmra.mrb[0].mxu0 %v1540
        %v1579 = vpop.f32.mrb[0].mxu0
        %v1580 = vadd.f32 0.0, %v1579
        %v1581 = vpop.f32.mrb[0].mxu0
        %v1582 = vpop.f32.mrb[0].mxu0
        %v1583 = vpop.f32.mrb[0].mxu0
        %1584 = vdwg.mxu0
        %1585 = vrot.lane.b32.xlu0 %v874, 104
        %v1586 = vpop.permute.xlu0 %1585
        %1587 = vrot.lane.b32.xlu0 %v874, 72
        %v1588 = vpop.permute.xlu0 %1587
        %v1590 = vsel %vm878, %v1586, 0
        %v1593 = vsel %vm878, %v1588, 0
        %1595 = vmatprep.subr.bf16.mxu0 0
        %1596 = vmatpush1.bf16.xpose.msra.mxu0 %v1593
        %1597 = vmatprep.subr.bf16.mxu0 0
        %1598 = vmatpush1.bf16.xpose.msra.mxu0 0
        %1599 = vmatprep.subr.bf16.mxu0 0
        %1600 = vmatpush1.bf16.xpose.msra.mxu0 0
        %1601 = vmatprep.subr.bf16.mxu0 0
        %1602 = vmatpush1.bf16.xpose.msra.mxu0 0
        %1603 = vmatprep.subr.bf16.mxu0 0
        %1604 = vmatpush1.bf16.xpose.msra.mxu0 0
        %1605 = vmatprep.subr.bf16.mxu0 0
        %1606 = vmatpush1.bf16.xpose.msra.mxu0 0
        %1607 = vmatprep.subr.bf16.mxu0 0
        %1608 = vmatpush1.bf16.xpose.msra.mxu0 0
        %1609 = vmatprep.subr.bf16.mxu0 0
        %1610 = vmatpush1.bf16.xpose.msra.mxu0 0
        %1611 = vmatprep.subr.bf16.mxu0 0
        %1612 = vmatpush1.bf16.xpose.msra.mxu0 0
        %1613 = vmatprep.subr.bf16.mxu0 0
        %1614 = vmatpush1.bf16.xpose.msra.mxu0 0
        %1615 = vmatprep.subr.bf16.mxu0 0
        %1616 = vmatpush1.bf16.xpose.msra.mxu0 0
        %1617 = vmatprep.subr.bf16.mxu0 0
        %1618 = vmatpush1.bf16.xpose.msra.mxu0 0
        %1619 = vmatprep.subr.bf16.mxu0 0
        %1620 = vmatpush1.bf16.xpose.msra.mxu0 0
        %1621 = vmatprep.subr.bf16.mxu0 0
        %1622 = vmatpush1.bf16.xpose.msra.mxu0 0
        %1623 = vmatprep.subr.bf16.mxu0 0
        %1624 = vmatpush1.bf16.xpose.msra.mxu0 0
        %1625 = vmatprep.subr.bf16.mxu0 0
        %1626 = vmatpush1.bf16.xpose.msra.mxu0 0
        %1627 = vmatprep.mubr.bf16.mxu0 0
        %1628 = vmatmul.mubr.bf16.gmra.mrb[0].mxu0 %v1590
        %v1629 = vpop.f32.mrb[0].mxu0
        %v1630 = vadd.f32 0.0, %v1629
        %v1631 = vpop.f32.mrb[0].mxu0
        %v1632 = vpop.f32.mrb[0].mxu0
        %v1633 = vpop.f32.mrb[0].mxu0
        %1634 = vdwg.mxu0
        %v1635 = vsel %vm878, %v1580, -inf
        %1636 = vmax.xlane.f32.xlu0 %v1635
        %v1637 = vpop.xlane.xlu0 %1636
        %v1638 = vsel %vm878, %v1630, -inf
        %1639 = vmax.xlane.f32.xlu0 %v1638
        %v1640 = vpop.xlane.xlu0 %1639
        %v1641 = vsub.f32 %v1580, %v1637
        %v1642 = vsub.f32 %v1630, %v1640
        %v1643 = vmul.f32 %v1641, 1.442695
        %v1644 = vpow.pop %v1643
        %v1645 = vmul.f32 %v1642, 1.442695
        %v1646 = vpow.pop %v1645
        %v1647 = vsel %vm878, %v1644, 0.0
        %1648 = vadd.xlane.f32.xlu0 %v1647
        %v1649 = vpop.xlane.xlu0 %1648
        %v1650 = vsel %vm878, %v1646, 0.0
        %1651 = vadd.xlane.f32.xlu0 %v1650
        %v1652 = vpop.xlane.xlu0 %1651
        %v1653 = vrcp.pop %v1649
        %v1654 = vrcp.pop %v1652
        %v1655 = vmul.f32 %v1644, %v1653
        %v1656 = vmul.f32 %v1646, %v1654
        %v1657 = vpack.c.bf16 %v1655, %v1655
        %v1658 = vpack.c.bf16 %v1656, %v1656
        %1659 = vrot.lane.b32.xlu0 %v873, 40
        %v1660 = vpop.permute.xlu0 %1659
        %v1662 = vsel %vm878, %v1657, 0
        %v1665 = vsel %vm1003, %v1660, 0
        %1667 = vmatprep.subr.bf16.mxu0 0
        %1668 = vmatpush1.bf16.msra.mxu0 %v1665
        %1669 = vmatprep.subr.bf16.mxu0 0
        %1670 = vmatpush1.bf16.msra.mxu0 0
        %1671 = vmatprep.subr.bf16.mxu0 0
        %1672 = vmatpush1.bf16.msra.mxu0 0
        %1673 = vmatprep.subr.bf16.mxu0 0
        %1674 = vmatpush1.bf16.msra.mxu0 0
        %1675 = vmatprep.subr.bf16.mxu0 0
        %1676 = vmatpush1.bf16.msra.mxu0 0
        %1677 = vmatprep.subr.bf16.mxu0 0
        %1678 = vmatpush1.bf16.msra.mxu0 0
        %1679 = vmatprep.subr.bf16.mxu0 0
        %1680 = vmatpush1.bf16.msra.mxu0 0
        %1681 = vmatprep.subr.bf16.mxu0 0
        %1682 = vmatpush1.bf16.msra.mxu0 0
        %1683 = vmatprep.subr.bf16.mxu0 0
        %1684 = vmatpush1.bf16.msra.mxu0 0
        %1685 = vmatprep.subr.bf16.mxu0 0
        %1686 = vmatpush1.bf16.msra.mxu0 0
        %1687 = vmatprep.subr.bf16.mxu0 0
        %1688 = vmatpush1.bf16.msra.mxu0 0
        %1689 = vmatprep.subr.bf16.mxu0 0
        %1690 = vmatpush1.bf16.msra.mxu0 0
        %1691 = vmatprep.subr.bf16.mxu0 0
        %1692 = vmatpush1.bf16.msra.mxu0 0
        %1693 = vmatprep.subr.bf16.mxu0 0
        %1694 = vmatpush1.bf16.msra.mxu0 0
        %1695 = vmatprep.subr.bf16.mxu0 0
        %1696 = vmatpush1.bf16.msra.mxu0 0
        %1697 = vmatprep.subr.bf16.mxu0 0
        %1698 = vmatpush1.bf16.msra.mxu0 0
        %1699 = vmatprep.mubr.bf16.mxu0 0
        %1700 = vmatmul.mubr.bf16.gmra.mrb[0].mxu0 %v1662
        %v1701 = vpop.f32.mrb[0].mxu0
        %v1702 = vadd.f32 0.0, %v1701
        %v1703 = vpop.f32.mrb[0].mxu0
        %v1704 = vpop.f32.mrb[0].mxu0
        %v1705 = vpop.f32.mrb[0].mxu0
        %1706 = vdwg.mxu0
        %1707 = vrot.lane.b32.xlu0 %v874, 40
        %v1708 = vpop.permute.xlu0 %1707
        %v1710 = vsel %vm878, %v1658, 0
        %v1713 = vsel %vm1003, %v1708, 0
        %1715 = vmatprep.subr.bf16.mxu0 0
        %1716 = vmatpush1.bf16.msra.mxu0 %v1713
        %1717 = vmatprep.subr.bf16.mxu0 0
        %1718 = vmatpush1.bf16.msra.mxu0 0
        %1719 = vmatprep.subr.bf16.mxu0 0
        %1720 = vmatpush1.bf16.msra.mxu0 0
        %1721 = vmatprep.subr.bf16.mxu0 0
        %1722 = vmatpush1.bf16.msra.mxu0 0
        %1723 = vmatprep.subr.bf16.mxu0 0
        %1724 = vmatpush1.bf16.msra.mxu0 0
        %1725 = vmatprep.subr.bf16.mxu0 0
        %1726 = vmatpush1.bf16.msra.mxu0 0
        %1727 = vmatprep.subr.bf16.mxu0 0
        %1728 = vmatpush1.bf16.msra.mxu0 0
        %1729 = vmatprep.subr.bf16.mxu0 0
        %1730 = vmatpush1.bf16.msra.mxu0 0
        %1731 = vmatprep.subr.bf16.mxu0 0
        %1732 = vmatpush1.bf16.msra.mxu0 0
        %1733 = vmatprep.subr.bf16.mxu0 0
        %1734 = vmatpush1.bf16.msra.mxu0 0
        %1735 = vmatprep.subr.bf16.mxu0 0
        %1736 = vmatpush1.bf16.msra.mxu0 0
        %1737 = vmatprep.subr.bf16.mxu0 0
        %1738 = vmatpush1.bf16.msra.mxu0 0
        %1739 = vmatprep.subr.bf16.mxu0 0
        %1740 = vmatpush1.bf16.msra.mxu0 0
        %1741 = vmatprep.subr.bf16.mxu0 0
        %1742 = vmatpush1.bf16.msra.mxu0 0
        %1743 = vmatprep.subr.bf16.mxu0 0
        %1744 = vmatpush1.bf16.msra.mxu0 0
        %1745 = vmatprep.subr.bf16.mxu0 0
        %1746 = vmatpush1.bf16.msra.mxu0 0
        %1747 = vmatprep.mubr.bf16.mxu0 0
        %1748 = vmatmul.mubr.bf16.gmra.mrb[0].mxu0 %v1710
        %v1749 = vpop.f32.mrb[0].mxu0
        %v1750 = vadd.f32 0.0, %v1749
        %v1751 = vpop.f32.mrb[0].mxu0
        %v1752 = vpop.f32.mrb[0].mxu0
        %v1753 = vpop.f32.mrb[0].mxu0
        %1754 = vdwg.mxu0
        %1757 = vrot.lane.b32.xlu0 %v1262, 8
        %v1758 = vpop.permute.xlu0 %1757
        %1759 = vrot.lane.b32.xlu0 %v1310, 8
        %v1760 = vpop.permute.xlu0 %1759
        %1765 = vrot.lane.b32.xlu0 %v1482, 16
        %v1766 = vpop.permute.xlu0 %1765
        %1767 = vrot.lane.b32.xlu0 %v1530, 16
        %v1768 = vpop.permute.xlu0 %1767
        %1773 = vrot.lane.b32.xlu0 %v1702, 24
        %v1774 = vpop.permute.xlu0 %1773
        %1775 = vrot.lane.b32.xlu0 %v1750, 24
        %v1776 = vpop.permute.xlu0 %1775
        %v1779 = vsel %vm878, %v1042, %v1758
        %v1780 = vsel %vm878, %v1090, %v1760
        %vm1781 = vcmask 130048
        %v1782 = vsel %vm1781, %v1779, %v1766
        %v1783 = vsel %vm1781, %v1780, %v1768
        %vm1784 = vcmask 195584
        %v1785 = vsel %vm1784, %v1782, %v1774
        %v1786 = vsel %vm1784, %v1783, %v1776
        %v1787 = vpack.c.bf16 %v1786, %v1785
        %v1789 = vlaneseq
        %v1790 = vshrl.u32 %v1789, 7
        %v1791 = vsub.s32 0, %v1790
        %v1792 = vrot.slane %v788, %v1791
        %v1798 = vunpack.c.l.b16 %v784
        %v1799 = vunpack.c.l.b16 %v785
        %v1800 = vunpack.c.l.b16 %v786
        %v1801 = vunpack.c.l.b16 %v787
        %v1802 = vpack.c.b16 %v1799, %v1798
        %v1803 = vpack.c.b16 %v1801, %v1800
        %v1807 = vsel %vm828, %v1787, 0
        %1809 = vmatprep.subr.bf16.mxu0 0
        %1810 = vmatpush1.bf16.msra.mxu0 %v1802
        %1811 = vmatprep.subr.bf16.mxu0 0
        %1812 = vmatpush1.bf16.msra.mxu0 %v1803
        %1813 = vmatprep.subr.bf16.mxu0 0
        %1814 = vmatpush1.bf16.msra.mxu0 0
        %1815 = vmatprep.subr.bf16.mxu0 0
        %1816 = vmatpush1.bf16.msra.mxu0 0
        %1817 = vmatprep.subr.bf16.mxu0 0
        %1818 = vmatpush1.bf16.msra.mxu0 0
        %1819 = vmatprep.subr.bf16.mxu0 0
        %1820 = vmatpush1.bf16.msra.mxu0 0
        %1821 = vmatprep.subr.bf16.mxu0 0
        %1822 = vmatpush1.bf16.msra.mxu0 0
        %1823 = vmatprep.subr.bf16.mxu0 0
        %1824 = vmatpush1.bf16.msra.mxu0 0
        %1825 = vmatprep.subr.bf16.mxu0 0
        %1826 = vmatpush1.bf16.msra.mxu0 0
        %1827 = vmatprep.subr.bf16.mxu0 0
        %1828 = vmatpush1.bf16.msra.mxu0 0
        %1829 = vmatprep.subr.bf16.mxu0 0
        %1830 = vmatpush1.bf16.msra.mxu0 0
        %1831 = vmatprep.subr.bf16.mxu0 0
        %1832 = vmatpush1.bf16.msra.mxu0 0
        %1833 = vmatprep.subr.bf16.mxu0 0
        %1834 = vmatpush1.bf16.msra.mxu0 0
        %1835 = vmatprep.subr.bf16.mxu0 0
        %1836 = vmatpush1.bf16.msra.mxu0 0
        %1837 = vmatprep.subr.bf16.mxu0 0
        %1838 = vmatpush1.bf16.msra.mxu0 0
        %1839 = vmatprep.subr.bf16.mxu0 0
        %1840 = vmatpush1.bf16.msra.mxu0 0
        %1841 = vmatprep.mubr.bf16.mxu0 0
        %1842 = vmatmul.mubr.bf16.gmra.mrb[0].mxu0 %v1807
        %v1843 = vpop.f32.mrb[0].mxu0
        %v1844 = vadd.f32 %v1792, %v1843
        %v1845 = vpop.f32.mrb[0].mxu0
        %v1846 = vpop.f32.mrb[0].mxu0
        %v1847 = vadd.f32 %v1792, %v1846
        %v1848 = vpop.f32.mrb[0].mxu0
        %1849 = vdwg.mxu0
        %v1850 = vadd.f32 %v807, %v1844
        %v1851 = vadd.f32 %v808, %v1847
        %v1852 = vsel %vm828, %v1850, 0.0
        %1853 = vadd.xlane.f32.xlu0 %v1852
        %v1854 = vpop.xlane.xlu0 %1853
        %v1855 = vsel %vm828, %v1851, 0.0
        %1856 = vadd.xlane.f32.xlu0 %v1855
        %v1857 = vpop.xlane.xlu0 %1856
        %v1858 = vrcp.pop 32.0
        %v1859 = vmul.f32 %v1854, %v1858
        %v1860 = vmul.f32 %v1857, %v1858
        %v1861 = vsub.f32 %v1850, %v1859
        %v1862 = vsub.f32 %v1851, %v1860
        %v1863 = vmul.f32 %v1861, %v1861
        %v1864 = vmul.f32 %v1862, %v1862
        %v1865 = vsel %vm828, %v1863, 0.0
        %1866 = vadd.xlane.f32.xlu0 %v1865
        %v1867 = vpop.xlane.xlu0 %1866
        %v1868 = vsel %vm828, %v1864, 0.0
        %1869 = vadd.xlane.f32.xlu0 %v1868
        %v1870 = vpop.xlane.xlu0 %1869
        %v1871 = vmul.f32 %v1867, %v1858
        %v1872 = vmul.f32 %v1870, %v1858
        %v1873 = vadd.f32 %v1871, 1e-05
        %v1874 = vadd.f32 %v1872, 1e-05
        %v1875 = vrsqrt.pop %v1873
        %v1876 = vrsqrt.pop %v1874
        %v1877 = vmul.f32 %v1861, %v1875
        %v1878 = vmul.f32 %v1862, %v1876
        %v1880 = vlaneseq
        %v1881 = vshrl.u32 %v1880, 7
        %v1882 = vsub.s32 0, %v1881
        %v1883 = vrot.slane %v789, %v1882
        %v1885 = vmul.f32 %v1877, %v1883
        %v1886 = vmul.f32 %v1878, %v1883
        %v1888 = vlaneseq
        %v1889 = vshrl.u32 %v1888, 7
        %v1890 = vsub.s32 0, %v1889
        %v1891 = vrot.slane %v790, %v1890
        %v1893 = vadd.f32 %v1885, %v1891
        %v1894 = vadd.f32 %v1886, %v1891
        %v1895 = vpack.c.bf16 %v1894, %v1893
        %v1897 = vlaneseq
        %v1898 = vshrl.u32 %v1897, 7
        %v1899 = vsub.s32 0, %v1898
        %v1900 = vrot.slane %v795, %v1899
        %v1906 = vunpack.c.l.b16 %v791
        %v1907 = vunpack.c.l.b16 %v792
        %v1908 = vunpack.c.l.b16 %v793
        %v1909 = vunpack.c.l.b16 %v794
        %v1910 = vpack.c.b16 %v1907, %v1906
        %v1911 = vpack.c.b16 %v1909, %v1908
        %v1915 = vsel %vm828, %v1895, 0
        %1917 = vmatprep.subr.bf16.mxu0 0
        %1918 = vmatpush1.bf16.msra.mxu0 %v1910
        %1919 = vmatprep.subr.bf16.mxu0 0
        %1920 = vmatpush1.bf16.msra.mxu0 %v1911
        %1921 = vmatprep.subr.bf16.mxu0 0
        %1922 = vmatpush1.bf16.msra.mxu0 0
        %1923 = vmatprep.subr.bf16.mxu0 0
        %1924 = vmatpush1.bf16.msra.mxu0 0
        %1925 = vmatprep.subr.bf16.mxu0 0
        %1926 = vmatpush1.bf16.msra.mxu0 0
        %1927 = vmatprep.subr.bf16.mxu0 0
        %1928 = vmatpush1.bf16.msra.mxu0 0
        %1929 = vmatprep.subr.bf16.mxu0 0
        %1930 = vmatpush1.bf16.msra.mxu0 0
        %1931 = vmatprep.subr.bf16.mxu0 0
        %1932 = vmatpush1.bf16.msra.mxu0 0
        %1933 = vmatprep.subr.bf16.mxu0 0
        %1934 = vmatpush1.bf16.msra.mxu0 0
        %1935 = vmatprep.subr.bf16.mxu0 0
        %1936 = vmatpush1.bf16.msra.mxu0 0
        %1937 = vmatprep.subr.bf16.mxu0 0
        %1938 = vmatpush1.bf16.msra.mxu0 0
        %1939 = vmatprep.subr.bf16.mxu0 0
        %1940 = vmatpush1.bf16.msra.mxu0 0
        %1941 = vmatprep.subr.bf16.mxu0 0
        %1942 = vmatpush1.bf16.msra.mxu0 0
        %1943 = vmatprep.subr.bf16.mxu0 0
        %1944 = vmatpush1.bf16.msra.mxu0 0
        %1945 = vmatprep.subr.bf16.mxu0 0
        %1946 = vmatpush1.bf16.msra.mxu0 0
        %1947 = vmatprep.subr.bf16.mxu0 0
        %1948 = vmatpush1.bf16.msra.mxu0 0
        %1949 = vmatprep.mubr.bf16.mxu0 0
        %1950 = vmatmul.mubr.bf16.gmra.mrb[0].mxu0 %v1915
        %v1951 = vpop.f32.mrb[0].mxu0
        %v1952 = vadd.f32 %v1900, %v1951
        %v1953 = vpop.f32.mrb[0].mxu0
        %v1954 = vpop.f32.mrb[0].mxu0
        %v1955 = vadd.f32 %v1900, %v1954
        %v1956 = vpop.f32.mrb[0].mxu0
        %1957 = vdwg.mxu0
        %v1958 = vmax.f32 %v1952, 0.0
        %v1959 = vmax.f32 %v1955, 0.0
        %v1960 = vpack.c.bf16 %v1959, %v1958
        %v1962 = vlaneseq
        %v1963 = vshrl.u32 %v1962, 7
        %v1964 = vsub.s32 0, %v1963
        %v1965 = vrot.slane %v804, %v1964
        %v1975 = vunpack.c.l.b16 %v796
        %v1976 = vunpack.c.l.b16 %v797
        %v1977 = vunpack.c.l.b16 %v798
        %v1978 = vunpack.c.l.b16 %v799
        %v1979 = vunpack.c.l.b16 %v800
        %v1980 = vunpack.c.l.b16 %v801
        %v1981 = vunpack.c.l.b16 %v802
        %v1982 = vunpack.c.l.b16 %v803
        %v1983 = vpack.c.b16 %v1976, %v1975
        %v1984 = vpack.c.b16 %v1978, %v1977
        %v1985 = vpack.c.b16 %v1980, %v1979
        %v1986 = vpack.c.b16 %v1982, %v1981
        %vm1991 = vcmask 523264
        %v1993 = vsel %vm1991, %v1960, 0
        %1995 = vmatprep.subr.bf16.mxu0 0
        %1996 = vmatpush1.bf16.msra.mxu0 %v1983
        %1997 = vmatprep.subr.bf16.mxu0 0
        %1998 = vmatpush1.bf16.msra.mxu0 %v1984
        %1999 = vmatprep.subr.bf16.mxu0 0
        %2000 = vmatpush1.bf16.msra.mxu0 %v1985
        %2001 = vmatprep.subr.bf16.mxu0 0
        %2002 = vmatpush1.bf16.msra.mxu0 %v1986
        %2003 = vmatprep.subr.bf16.mxu0 0
        %2004 = vmatpush1.bf16.msra.mxu0 0
        %2005 = vmatprep.subr.bf16.mxu0 0
        %2006 = vmatpush1.bf16.msra.mxu0 0
        %2007 = vmatprep.subr.bf16.mxu0 0
        %2008 = vmatpush1.bf16.msra.mxu0 0
        %2009 = vmatprep.subr.bf16.mxu0 0
        %2010 = vmatpush1.bf16.msra.mxu0 0
        %2011 = vmatprep.subr.bf16.mxu0 0
        %2012 = vmatpush1.bf16.msra.mxu0 0
        %2013 = vmatprep.subr.bf16.mxu0 0
        %2014 = vmatpush1.bf16.msra.mxu0 0
        %2015 = vmatprep.subr.bf16.mxu0 0
        %2016 = vmatpush1.bf16.msra.mxu0 0
        %2017 = vmatprep.subr.bf16.mxu0 0
        %2018 = vmatpush1.bf16.msra.mxu0 0
        %2019 = vmatprep.subr.bf16.mxu0 0
        %2020 = vmatpush1.bf16.msra.mxu0 0
        %2021 = vmatprep.subr.bf16.mxu0 0
        %2022 = vmatpush1.bf16.msra.mxu0 0
        %2023 = vmatprep.subr.bf16.mxu0 0
        %2024 = vmatpush1.bf16.msra.mxu0 0
        %2025 = vmatprep.subr.bf16.mxu0 0
        %2026 = vmatpush1.bf16.msra.mxu0 0
        %2027 = vmatprep.mubr.bf16.mxu0 0
        %2028 = vmatmul.mubr.bf16.gmra.mrb[0].mxu0 %v1993
        %v2029 = vpop.f32.mrb[0].mxu0
        %v2030 = vadd.f32 %v1965, %v2029
        %v2031 = vpop.f32.mrb[0].mxu0
        %v2032 = vpop.f32.mrb[0].mxu0
        %v2033 = vadd.f32 %v1965, %v2032
        %v2034 = vpop.f32.mrb[0].mxu0
        %2035 = vdwg.mxu0
        %v2036 = vadd.f32 %v1893, %v2030
        %v2037 = vadd.f32 %v1894, %v2033
        %v2038 = vsel %vm828, %v2036, 0.0
        %2039 = vadd.xlane.f32.xlu0 %v2038
        %v2040 = vpop.xlane.xlu0 %2039
        %v2041 = vsel %vm828, %v2037, 0.0
        %2042 = vadd.xlane.f32.xlu0 %v2041
        %v2043 = vpop.xlane.xlu0 %2042
        %v2044 = vmul.f32 %v2040, %v1858
        %v2045 = vmul.f32 %v2043, %v1858
        %v2046 = vsub.f32 %v2036, %v2044
        %v2047 = vsub.f32 %v2037, %v2045
        %v2048 = vmul.f32 %v2046, %v2046
        %v2049 = vmul.f32 %v2047, %v2047
        %v2050 = vsel %vm828, %v2048, 0.0
        %2051 = vadd.xlane.f32.xlu0 %v2050
        %v2052 = vpop.xlane.xlu0 %2051
        %v2053 = vsel %vm828, %v2049, 0.0
        %2054 = vadd.xlane.f32.xlu0 %v2053
        %v2055 = vpop.xlane.xlu0 %2054
        %v2056 = vmul.f32 %v2052, %v1858
        %v2057 = vmul.f32 %v2055, %v1858
        %v2058 = vadd.f32 %v2056, 1e-05
        %v2059 = vadd.f32 %v2057, 1e-05
        %v2060 = vrsqrt.pop %v2058
        %v2061 = vrsqrt.pop %v2059
        %v2062 = vmul.f32 %v2046, %v2060
        %v2063 = vmul.f32 %v2047, %v2061
        %v2065 = vlaneseq
        %v2066 = vshrl.u32 %v2065, 7
        %v2067 = vsub.s32 0, %v2066
        %v2068 = vrot.slane %v805, %v2067
        %v2070 = vmul.f32 %v2062, %v2068
        %v2071 = vmul.f32 %v2063, %v2068
        %v2073 = vlaneseq
        %v2074 = vshrl.u32 %v2073, 7
        %v2075 = vsub.s32 0, %v2074
        %v2076 = vrot.slane %v806, %v2075
        %v2078 = vadd.f32 %v2070, %v2076
        %v2079 = vadd.f32 %v2071, %v2076
        %2080 = vst.msk [vmem:[#allocation2] sm:$0xff] %vm828, %v2078
        %2081 = vst.msk [vmem:[#allocation2 + $0x8] sm:$0xff] %vm828, %v2079
        %p2082 = scmp.eq.s32.totalorder %s39, 1
        // Predicated region
        $region105: #{tpu_custom_call.1} parent=79 // pred_check
          %p2083 = pneg %p2082
        $region106: #{tpu_custom_call.1} parent=79 // pred_check_branch
          %2085 = sbr.rel (%p2083) target = $region108
        $region107: #{tpu_custom_call.1} parent=79 // pred_region
          %v2086 = vld [vmem:[%s13] sm:$0x1]
          %v2087 = vld [vmem:[%s14] sm:$0x1]
          %v2088 = vsel %vm828, %v2078, 0.0
          %2089 = vadd.xlane.f32.xlu0 %v2088
          %v2090 = vpop.xlane.xlu0 %2089
          %v2091 = vsel %vm828, %v2079, 0.0
          %2092 = vadd.xlane.f32.xlu0 %v2091
          %v2093 = vpop.xlane.xlu0 %2092
          %v2094 = vmul.f32 %v2090, %v1858
          %v2095 = vmul.f32 %v2093, %v1858
          %v2096 = vsub.f32 %v2078, %v2094
          %v2097 = vsub.f32 %v2079, %v2095
          %v2098 = vmul.f32 %v2096, %v2096
          %v2099 = vmul.f32 %v2097, %v2097
          %v2100 = vsel %vm828, %v2098, 0.0
          %2101 = vadd.xlane.f32.xlu0 %v2100
          %v2102 = vpop.xlane.xlu0 %2101
          %v2103 = vsel %vm828, %v2099, 0.0
          %2104 = vadd.xlane.f32.xlu0 %v2103
          %v2105 = vpop.xlane.xlu0 %2104
          %v2106 = vmul.f32 %v2102, %v1858
          %v2107 = vmul.f32 %v2105, %v1858
          %v2108 = vadd.f32 %v2106, 1e-05
          %v2109 = vadd.f32 %v2107, 1e-05
          %v2110 = vrsqrt.pop %v2108
          %v2111 = vrsqrt.pop %v2109
          %v2112 = vmul.f32 %v2096, %v2110
          %v2113 = vmul.f32 %v2097, %v2111
          %v2115 = vlaneseq
          %v2116 = vshrl.u32 %v2115, 7
          %v2117 = vsub.s32 0, %v2116
          %v2118 = vrot.slane %v2086, %v2117
          %v2120 = vmul.f32 %v2112, %v2118
          %v2121 = vmul.f32 %v2113, %v2118
          %v2123 = vlaneseq
          %v2124 = vshrl.u32 %v2123, 7
          %v2125 = vsub.s32 0, %v2124
          %v2126 = vrot.slane %v2087, %v2125
          %v2128 = vadd.f32 %v2120, %v2126
          %v2129 = vadd.f32 %v2121, %v2126
          %2130 = vst.msk [vmem:[#allocation12] sm:$0xff] %vm828, %v2128
          %2131 = vst.msk [vmem:[#allocation12 + $0x8] sm:$0xff] %vm828, %v2129
        $region108: #{tpu_custom_call.1} parent=79 // pred_fallthru
          _
        // Predicated region
        $region109: #{tpu_custom_call.1} parent=79 // pred_check
          %p2132 = pneg %p444
        $region110: #{tpu_custom_call.1} parent=79 // pred_check_branch
          %2134 = sbr.rel (%p2132) target = $region112
        $region111: #{tpu_custom_call.1} parent=79 // pred_region
          %s2135 = smul.u32 2, %s38
          %s2137 = ssub.s32 256, 256
          %2138 = vsyncadd [#allocation5], %s2137
          %s2139 = smul.addr %s2135, 128
          %s2140 = scalar_lea.hbm %s15, %s2139
          %s2141 = sshll.u32 [#allocation12], 4
          %s2142 = int_to_ptr.vmem [resolvable:$true] %s2141
          %2147 = dma.vmem_to_hbm [thread:$0]  %s2142, 256, %s2140, [#allocation5], 128, 128, 8
        $region112: #{tpu_custom_call.1} parent=79 // pred_fallthru
          _
        // Predicated region
        $region113: #{tpu_custom_call.1} parent=79 // pred_check
          %p2148 = pneg %p444
        $region114: #{tpu_custom_call.1} parent=79 // pred_check_branch
          %2150 = sbr.rel (%p2148) target = $region116
        $region115: #{tpu_custom_call.1} parent=79 // pred_region
          %2151 = dma.done [#allocation5], 256
        $region116: #{tpu_custom_call.1} parent=79 // pred_fallthru
          _
      $region80: #{tpu_custom_call.1} parent=5 // pred_fallthru
        _
      %p2152 = scmp.le.s32.totalorder 2, %s29
      // Predicated region
      $region117: #{tpu_custom_call.1} parent=5 // pred_check
        %p2153 = pneg %p2152
      $region118: #{tpu_custom_call.1} parent=5 // pred_check_branch
        %2155 = sbr.rel (%p2153) target = $region120
      $region119: #{tpu_custom_call.1} parent=5 // pred_region
        %s2156 = ssub.s32 %s29, 2
      $region120: #{tpu_custom_call.1} parent=5 // pred_fallthru
        _
    $region6: #{tpu_custom_call.1} parent=1 // loop_footer
      %s33 = sadd.s32 1, %s29
    $region7: #{tpu_custom_call.1} parent=1 // loop_footer_branch
      %28 = sbr.rel target = $region3
    $region8: #{tpu_custom_call.1} parent=1 // loop_exit
      _
    %2157 = vsyncpa [#allocation4], 1
    %s2158 = scalar_lea.sflag [#allocation4], 1
    %2159 = vsyncpa %s2158, 1
    %2160 = vsyncpa [#allocation7], 1
    %s2161 = scalar_lea.sflag [#allocation7], 1
    %2162 = vsyncpa %s2161, 1
    %2163 = vsyncpa [#allocation10], 1
    %s2164 = scalar_lea.sflag [#allocation10], 1
    %2165 = vsyncpa %s2164, 1
    %2166 = vsyncpa [#allocation5], 1
    %s2167 = scalar_lea.sflag [#allocation5], 1
    %2168 = vsyncpa %s2167, 1

</llo_original>
